<compile_context>
chip_gen: v5e
topology: v5e:2x2
jax: 0.10.0
libtpu: 0.0.40
codegen_flags: <defaults>
</compile_context>

<pallas_src>
import functools

import jax
import jax.numpy as jnp
from jax.experimental import pallas as pl
from jax.experimental.pallas import tpu as pltpu


# ----------------------------------------------------------------------------
# Small helpers.
# ----------------------------------------------------------------------------
def _round_up(x, m):
    return ((x + m - 1) // m) * m


def _pad2(a, rows, cols):
    """Zero-pad a 2-D array up to (rows, cols)."""
    return jnp.pad(a, ((0, rows - a.shape[0]), (0, cols - a.shape[1])))


def _pick_block(dim, target, align):
    """Largest aligned tile that divides `dim`, else full extent."""
    if dim <= target:
        return dim
    t = (target // align) * align
    while t >= align:
        if dim % t == 0:
            return t
        t -= align
    return dim


# ----------------------------------------------------------------------------
# Generic tiled matmul + bias kernel (input and output projections).
# ----------------------------------------------------------------------------
def _matmul_bias_kernel(x_ref, w_ref, b_ref, o_ref, acc_ref):
    k = pl.program_id(2)

    @pl.when(k == 0)
    def _():
        acc_ref[...] = jnp.zeros_like(acc_ref)

    acc_ref[...] += jnp.dot(x_ref[...], w_ref[...],
                            preferred_element_type=jnp.float32)

    @pl.when(k == pl.num_programs(2) - 1)
    def _():
        o_ref[...] = (acc_ref[...] + b_ref[...]).astype(o_ref.dtype)


def matmul_bias(x, w, b, *, out_dtype=jnp.float32, tm=256, tn=256, tk=512):
    """(M, K) @ (K, N) + (1, N) with a tiled, megacore-parallel Pallas kernel.

    All call sites pad M to a multiple of 8 and K/N to multiples of 128, so
    _pick_block always returns legal (8,128)-aligned tiles.
    """
    M, K = x.shape
    _, N = w.shape
    tm = _pick_block(M, tm, 8)
    tk = _pick_block(K, tk, 128)
    tn = _pick_block(N, tn, 128)
    grid = (M // tm, N // tn, K // tk)

    return pl.pallas_call(
        _matmul_bias_kernel,
        out_shape=jax.ShapeDtypeStruct((M, N), out_dtype),
        grid_spec=pltpu.PrefetchScalarGridSpec(
            num_scalar_prefetch=0,
            grid=grid,
            in_specs=[
                pl.BlockSpec((tm, tk), lambda i, j, k: (i, k)),
                pl.BlockSpec((tk, tn), lambda i, j, k: (k, j)),
                pl.BlockSpec((1, tn), lambda i, j, k: (0, j)),
            ],
            out_specs=pl.BlockSpec((tm, tn), lambda i, j, k: (i, j)),
            scratch_shapes=[pltpu.VMEM((tm, tn), jnp.float32)],
        ),
        compiler_params=pltpu.CompilerParams(
            dimension_semantics=("parallel", "parallel", "arbitrary"),
            vmem_limit_bytes=32 * 1024 * 1024),
    )(x, w, b)


# ----------------------------------------------------------------------------
# Recurrent GRU kernel: only h @ W_hh_cat + gate elementwise math per step.
# ----------------------------------------------------------------------------
def _gru_recurrent_kernel(i_ref, h0_ref, whh_ref, bhn_ref, hs_ref, h_scr,
                          *, hidden_size, t_block):
    """One grid iteration == `t_block` GRU time steps for one batch block.

    Grid: (batch_blocks [parallel], time_blocks [arbitrary]).

    i_ref:   (Tt, Bb, 3H)  precomputed x@W_ih + folded biases (gate order r,z,n)
    h0_ref:  (Bb, H)       initial hidden state for this batch block
    whh_ref: (H, 3H)       fused hidden->gate weights
    bhn_ref: (1, H)        n-gate hidden bias (stays inside r*(...), PyTorch)
    hs_ref:  (Bb, Tt, H)   hidden states, written batch-major
    h_scr:   (Bb, H)       VMEM scratch carrying h across time blocks
    """
    H = hidden_size
    t = pl.program_id(1)

    @pl.when(t == 0)
    def _():
        h_scr[...] = h0_ref[...].astype(jnp.float32)

    # Hoisted out of the unrolled loop: weight load and bias broadcast.
    whh = whh_ref[...]
    bhn = jnp.broadcast_to(bhn_ref[...], (h0_ref.shape[0], H))

    h = h_scr[...]
    for s in range(t_block):
        # Single fused MXU push for all three hidden->gate projections.
        gh = jnp.dot(h, whh, preferred_element_type=jnp.float32)
        gi = i_ref[s].astype(jnp.float32)
        r = jax.nn.sigmoid(gi[:, 0 * H:1 * H] + gh[:, 0 * H:1 * H])
        z = jax.nn.sigmoid(gi[:, 1 * H:2 * H] + gh[:, 1 * H:2 * H])
        n = jnp.tanh(gi[:, 2 * H:3 * H] + r * (gh[:, 2 * H:3 * H] + bhn))
        h = (1.0 - z) * n + z * h
        # Batch-major store so the vocab projection consumes hs with no transpose.
        hs_ref[:, pl.ds(s, 1), :] = h[:, None, :].astype(hs_ref.dtype)

    h_scr[...] = h


# ----------------------------------------------------------------------------
# Forward pass wrapper.
# ----------------------------------------------------------------------------
@jax.jit
def policy_network_forward(tokens, params, hidden=None):
    """tokens: int32 (B, T). Returns (logits (B, T, V), hidden (1, B, H))."""
    emb_table = params["embedding"]        # (V, H)
    w_ih = params["w_ih"]                  # (3, H, H), layout for x @ W
    w_hh = params["w_hh"]                  # (3, H, H)
    b_ih = params["b_ih"]                  # (3, 1, H)
    b_hh = params["b_hh"]                  # (3, 1, H)
    w_fc = params["w_fc"]                  # (H, V)
    b_fc = params["b_fc"]                  # (1, V)

    B, T = tokens.shape
    H = emb_table.shape[1]
    V = w_fc.shape[1]

    # --- padded sizes: lanes (128), sublanes (8) -----------------------------
    Hp = _round_up(H, 128)
    Bp = _round_up(B, 8)
    Vp = _round_up(V, 128)
    Tp = _round_up(T, 8)
    Tt = 16 if (Tp % 16 == 0) else 8       # time steps per grid iteration
    # Batch-block split of the serial recurrence (2 blocks -> 2 TCs on v7x).
    nb = 2 if (Bp % 16 == 0) else 1
    Bb = Bp // nb

    # --- fuse / fold / pad parameters (cheap, once per call, exact zeros) ----
    # Per-gate padding keeps every gate slice lane-aligned at Hp.
    w_ih_cat = jnp.concatenate([_pad2(w_ih[g], Hp, Hp) for g in range(3)], axis=1)  # (Hp, 3Hp)
    w_hh_cat = jnp.concatenate([_pad2(w_hh[g], Hp, Hp) for g in range(3)], axis=1)  # (Hp, 3Hp)
    # r/z gates: both biases fold into the input projection; n gate keeps b_hh
    # inside the r*(W_hh h + b_hh) term (PyTorch GRU semantics).
    b_in = jnp.concatenate([_pad2(b_ih[0] + b_hh[0], 1, Hp),
                            _pad2(b_ih[1] + b_hh[1], 1, Hp),
                            _pad2(b_ih[2], 1, Hp)], axis=1)                         # (1, 3Hp)
    b_hh_n = _pad2(b_hh[2], 1, Hp)                                                  # (1, Hp)
    emb_p = _pad2(emb_table, emb_table.shape[0], Hp)                                # (V, Hp)
    w_fc_p = _pad2(w_fc, Hp, Vp)                                                    # (Hp, Vp)
    b_fc_p = _pad2(b_fc, 1, Vp)                                                     # (1, Vp)

    # --- embedding gather, time-major, padded to (Tp, Bp, Hp) ----------------
    x_tb = emb_p[tokens.T].astype(jnp.float32)                   # (T, B, Hp)
    x_tb = jnp.pad(x_tb, ((0, Tp - T), (0, Bp - B), (0, 0)))     # (Tp, Bp, Hp)

    # --- 1) batched input projection for all time steps at once --------------
    i_gates = matmul_bias(x_tb.reshape(Tp * Bp, Hp), w_ih_cat, b_in)   # (Tp*Bp, 3Hp)
    i_gates_tb = i_gates.reshape(Tp, Bp, 3 * Hp)

    # --- 2) sequential recurrence (only h @ W_hh per step) -------------------
    if hidden is None:
        h0 = jnp.zeros((Bp, Hp), jnp.float32)
    else:
        h0 = jnp.pad(hidden[0].astype(jnp.float32), ((0, Bp - B), (0, Hp - H)))

    hs = pl.pallas_call(
        functools.partial(_gru_recurrent_kernel, hidden_size=Hp, t_block=Tt),
        out_shape=jax.ShapeDtypeStruct((Bp, Tp, Hp), jnp.float32),
        grid_spec=pltpu.PrefetchScalarGridSpec(
            num_scalar_prefetch=0,
            grid=(nb, Tp // Tt),
            in_specs=[
                pl.BlockSpec((Tt, Bb, 3 * Hp), lambda b, t: (t, b, 0)),  # input gates
                pl.BlockSpec((Bb, Hp), lambda b, t: (b, 0)),             # h0
                pl.BlockSpec((Hp, 3 * Hp), lambda b, t: (0, 0)),         # W_hh fused
                pl.BlockSpec((1, Hp), lambda b, t: (0, 0)),              # b_hh (n gate)
            ],
            out_specs=pl.BlockSpec((Bb, Tt, Hp), lambda b, t: (b, t, 0)),  # hs batch-major
            scratch_shapes=[pltpu.VMEM((Bb, Hp), jnp.float32)],
        ),
        compiler_params=pltpu.CompilerParams(
            # batch blocks independent (megacore-shardable); time is serial.
            dimension_semantics=("parallel", "arbitrary"),
            vmem_limit_bytes=32 * 1024 * 1024),
    )(i_gates_tb, h0, w_hh_cat, b_hh_n)                          # (Bp, Tp, Hp)

    # --- 3) batched output projection, lane-dense, no transpose --------------
    logits_flat = matmul_bias(hs.reshape(Bp * Tp, Hp), w_fc_p, b_fc_p,
                              tm=512)                            # (Bp*Tp, Vp)
    logits = logits_flat.reshape(Bp, Tp, Vp)[:B, :T, :V]

    # Final hidden state = hidden state at the last *real* time step.
    h_last = hs[:B, T - 1, :H]
    return logits, h_last[None]            # hidden: (1, B, H)


# ----------------------------------------------------------------------------
# Parameter init + pure-JAX reference.
# ----------------------------------------------------------------------------
def init_params(key, vocab_size, hidden_size):
    keys = jax.random.split(key, 7)
    scale = 0.1
    return {
        "embedding": scale * jax.random.normal(keys[0], (vocab_size, hidden_size), jnp.float32),
        "w_ih": scale * jax.random.normal(keys[1], (3, hidden_size, hidden_size), jnp.float32),
        "w_hh": scale * jax.random.normal(keys[2], (3, hidden_size, hidden_size), jnp.float32),
        "b_ih": scale * jax.random.normal(keys[3], (3, 1, hidden_size), jnp.float32),
        "b_hh": scale * jax.random.normal(keys[4], (3, 1, hidden_size), jnp.float32),
        "w_fc": scale * jax.random.normal(keys[5], (hidden_size, vocab_size), jnp.float32),
        "b_fc": scale * jax.random.normal(keys[6], (1, vocab_size), jnp.float32),
    }


def _reference_forward(tokens, params, hidden=None):
    """Pure-JAX reference (lax.scan GRU) for correctness checking."""
    emb = params["embedding"][tokens].astype(jnp.float32)  # (B, T, H)
    B, T, H = emb.shape
    h0 = jnp.zeros((B, H), jnp.float32) if hidden is None else hidden[0]

    def step(h, x_t):
        i_r = x_t @ params["w_ih"][0] + params["b_ih"][0]
        i_z = x_t @ params["w_ih"][1] + params["b_ih"][1]
        i_n = x_t @ params["w_ih"][2] + params["b_ih"][2]
        h_r = h @ params["w_hh"][0] + params["b_hh"][0]
        h_z = h @ params["w_hh"][1] + params["b_hh"][1]
        h_n = h @ params["w_hh"][2] + params["b_hh"][2]
        r = jax.nn.sigmoid(i_r + h_r)
        z = jax.nn.sigmoid(i_z + h_z)
        n = jnp.tanh(i_n + r * h_n)
        h_new = (1.0 - z) * n + z * h
        return h_new, h_new

    h_last, hs = jax.lax.scan(step, h0, jnp.transpose(emb, (1, 0, 2)))
    logits = jnp.einsum("tbh,hv->tbv", hs, params["w_fc"]) + params["b_fc"]
    return jnp.transpose(logits, (1, 0, 2)), h_last[None]


if __name__ == "__main__":
    VOCAB = 64
    HIDDEN = 32
    B, T = 2, 8

    key = jax.random.PRNGKey(0)
    k_params, k_tokens = jax.random.split(key)
    params = init_params(k_params, VOCAB, HIDDEN)
    tokens = jax.random.randint(k_tokens, (B, T), 0, VOCAB, dtype=jnp.int32)

    logits, hidden = policy_network_forward(tokens, params)
    jax.block_until_ready((logits, hidden))

    ref_logits, ref_hidden = _reference_forward(tokens, params)
    assert logits.shape == (B, T, VOCAB)
    assert hidden.shape == (1, B, HIDDEN)
    assert jnp.allclose(logits, ref_logits, atol=1e-4), "logits mismatch"
    assert jnp.allclose(hidden, ref_hidden, atol=1e-4), "hidden mismatch"

    print("KERNEL_OK")
</pallas_src>

<mosaic_0001>
module attributes {stable_mosaic.version = 11 : i64} {
  func.func @_matmul_bias_kernel(%arg0: i32, %arg1: i32, %arg2: i32, %arg3: memref<64x128xf32, #tpu.memory_space<vmem>>, %arg4: memref<128x128xf32, #tpu.memory_space<vmem>>, %arg5: memref<1x128xf32, #tpu.memory_space<vmem>>, %arg6: memref<64x128xf32, #tpu.memory_space<vmem>>, %arg7: memref<64x128xf32, #tpu.memory_space<vmem>>) attributes {dimension_semantics = [#tpu.dimension_semantics<parallel>, #tpu.dimension_semantics<parallel>, #tpu.dimension_semantics<arbitrary>], iteration_bounds = array<i64: 1, 3, 1>, scalar_prefetch = 0 : i64, scratch_operands = 1 : i64, tpu.core_type = #tpu.core_type<tc>, window_params = [{transform_indices = @transform_0, window_bounds = array<i64: 64, 128>}, {transform_indices = @transform_1, window_bounds = array<i64: 128, 128>}, {transform_indices = @transform_2, window_bounds = array<i64: 1, 128>}, {transform_indices = @transform_3, window_bounds = array<i64: 64, 128>}]} {
    %c0_i32 = arith.constant 0 : i32
    %0 = arith.cmpi eq, %arg2, %c0_i32 : i32
    %1 = arith.extui %0 : i1 to i32
    %c0_i32_0 = arith.constant 0 : i32
    %2 = arith.cmpi ne, %1, %c0_i32_0 : i32
    scf.if %2 {
      %cst_10 = arith.constant 0.000000e+00 : f32
      %12 = vector.broadcast %cst_10 : f32 to vector<64x128xf32>
      %c0_11 = arith.constant 0 : index
      %c0_12 = arith.constant 0 : index
      %13 = vector.load %arg7[%c0_11, %c0_12] : memref<64x128xf32, #tpu.memory_space<vmem>>, vector<64x128xf32>
      tpu.vector_store %arg7[%c0_11, %c0_12], %12 {strides = array<i32>} : memref<64x128xf32, #tpu.memory_space<vmem>>, vector<64x128xf32>,
    } else {
    }
    %c0 = arith.constant 0 : index
    %c0_1 = arith.constant 0 : index
    %3 = vector.load %arg7[%c0, %c0_1] : memref<64x128xf32, #tpu.memory_space<vmem>>, vector<64x128xf32>
    %c0_2 = arith.constant 0 : index
    %c0_3 = arith.constant 0 : index
    %4 = vector.load %arg3[%c0_2, %c0_3] : memref<64x128xf32, #tpu.memory_space<vmem>>, vector<64x128xf32>
    %c0_4 = arith.constant 0 : index
    %c0_5 = arith.constant 0 : index
    %5 = vector.load %arg4[%c0_4, %c0_5] : memref<128x128xf32, #tpu.memory_space<vmem>>, vector<128x128xf32>
    %cst = arith.constant dense<0.000000e+00> : vector<64x128xf32>
    %6 = tpu.matmul %4, %5, %cst {dimension_numbers = #tpu.dot_dimension_numbers<[1], [0], [0], [1], [0, 0, 1, 1], [], []>} : vector<64x128xf32>, vector<128x128xf32>, vector<64x128xf32> -> vector<64x128xf32>
    %7 = arith.addf %3, %6 : vector<64x128xf32>
    %c0_6 = arith.constant 0 : index
    %c0_7 = arith.constant 0 : index
    %8 = vector.load %arg7[%c0_6, %c0_7] : memref<64x128xf32, #tpu.memory_space<vmem>>, vector<64x128xf32>
    tpu.vector_store %arg7[%c0_6, %c0_7], %7 {strides = array<i32>} : memref<64x128xf32, #tpu.memory_space<vmem>>, vector<64x128xf32>,
    %c0_i32_8 = arith.constant 0 : i32
    %9 = arith.cmpi eq, %arg2, %c0_i32_8 : i32
    %10 = arith.extui %9 : i1 to i32
    %c0_i32_9 = arith.constant 0 : i32
    %11 = arith.cmpi ne, %10, %c0_i32_9 : i32
    scf.if %11 {
      %c0_10 = arith.constant 0 : index
      %c0_11 = arith.constant 0 : index
      %12 = vector.load %arg7[%c0_10, %c0_11] : memref<64x128xf32, #tpu.memory_space<vmem>>, vector<64x128xf32>
      %c0_12 = arith.constant 0 : index
      %c0_13 = arith.constant 0 : index
      %13 = vector.load %arg5[%c0_12, %c0_13] : memref<1x128xf32, #tpu.memory_space<vmem>>, vector<1x128xf32>
      %14 = vector.broadcast %13 : vector<1x128xf32> to vector<64x128xf32>
      %15 = arith.addf %12, %14 : vector<64x128xf32>
      %c0_14 = arith.constant 0 : index
      %c0_15 = arith.constant 0 : index
      %16 = vector.load %arg6[%c0_14, %c0_15] : memref<64x128xf32, #tpu.memory_space<vmem>>, vector<64x128xf32>
      tpu.vector_store %arg6[%c0_14, %c0_15], %15 {strides = array<i32>} : memref<64x128xf32, #tpu.memory_space<vmem>>, vector<64x128xf32>,
    } else {
    }
    return
  }
  func.func @transform_0(%arg0: i32, %arg1: i32, %arg2: i32) -> (i32, i32) {
    %c0_i32 = arith.constant 0 : i32
    return %arg0, %arg2 : i32, i32
  }
  func.func @transform_1(%arg0: i32, %arg1: i32, %arg2: i32) -> (i32, i32) {
    %c0_i32 = arith.constant 0 : i32
    return %arg2, %arg1 : i32, i32
  }
  func.func @transform_2(%arg0: i32, %arg1: i32, %arg2: i32) -> (i32, i32) {
    %c0_i32 = arith.constant 0 : i32
    %c0_i32_0 = arith.constant 0 : i32
    return %c0_i32, %arg1 : i32, i32
  }
  func.func @transform_3(%arg0: i32, %arg1: i32, %arg2: i32) -> (i32, i32) {
    %c0_i32 = arith.constant 0 : i32
    return %arg0, %arg1 : i32, i32
  }
}

module attributes {stable_mosaic.version = 11 : i64} {
  func.func @_matmul_bias_kernel(%arg0: i32, %arg1: i32, %arg2: i32, %arg3: memref<64x128xf32, #tpu.memory_space<vmem>>, %arg4: memref<128x128xf32, #tpu.memory_space<vmem>>, %arg5: memref<1x128xf32, #tpu.memory_space<vmem>>, %arg6: memref<64x128xf32, #tpu.memory_space<vmem>>, %arg7: memref<64x128xf32, #tpu.memory_space<vmem>>) attributes {dimension_semantics = [#tpu.dimension_semantics<parallel>, #tpu.dimension_semantics<parallel>, #tpu.dimension_semantics<arbitrary>], iteration_bounds = array<i64: 1, 1, 1>, scalar_prefetch = 0 : i64, scratch_operands = 1 : i64, tpu.core_type = #tpu.core_type<tc>, window_params = [{transform_indices = @transform_0, window_bounds = array<i64: 64, 128>}, {transform_indices = @transform_1, window_bounds = array<i64: 128, 128>}, {transform_indices = @transform_2, window_bounds = array<i64: 1, 128>}, {transform_indices = @transform_3, window_bounds = array<i64: 64, 128>}]} {
    %c0_i32 = arith.constant 0 : i32
    %0 = arith.cmpi eq, %arg2, %c0_i32 : i32
    %1 = arith.extui %0 : i1 to i32
    %c0_i32_0 = arith.constant 0 : i32
    %2 = arith.cmpi ne, %1, %c0_i32_0 : i32
    scf.if %2 {
      %cst_10 = arith.constant 0.000000e+00 : f32
      %12 = vector.broadcast %cst_10 : f32 to vector<64x128xf32>
      %c0_11 = arith.constant 0 : index
      %c0_12 = arith.constant 0 : index
      %13 = vector.load %arg7[%c0_11, %c0_12] : memref<64x128xf32, #tpu.memory_space<vmem>>, vector<64x128xf32>
      tpu.vector_store %arg7[%c0_11, %c0_12], %12 {strides = array<i32>} : memref<64x128xf32, #tpu.memory_space<vmem>>, vector<64x128xf32>,
    } else {
    }
    %c0 = arith.constant 0 : index
    %c0_1 = arith.constant 0 : index
    %3 = vector.load %arg7[%c0, %c0_1] : memref<64x128xf32, #tpu.memory_space<vmem>>, vector<64x128xf32>
    %c0_2 = arith.constant 0 : index
    %c0_3 = arith.constant 0 : index
    %4 = vector.load %arg3[%c0_2, %c0_3] : memref<64x128xf32, #tpu.memory_space<vmem>>, vector<64x128xf32>
    %c0_4 = arith.constant 0 : index
    %c0_5 = arith.constant 0 : index
    %5 = vector.load %arg4[%c0_4, %c0_5] : memref<128x128xf32, #tpu.memory_space<vmem>>, vector<128x128xf32>
    %cst = arith.constant dense<0.000000e+00> : vector<64x128xf32>
    %6 = tpu.matmul %4, %5, %cst {dimension_numbers = #tpu.dot_dimension_numbers<[1], [0], [0], [1], [0, 0, 1, 1], [], []>} : vector<64x128xf32>, vector<128x128xf32>, vector<64x128xf32> -> vector<64x128xf32>
    %7 = arith.addf %3, %6 : vector<64x128xf32>
    %c0_6 = arith.constant 0 : index
    %c0_7 = arith.constant 0 : index
    %8 = vector.load %arg7[%c0_6, %c0_7] : memref<64x128xf32, #tpu.memory_space<vmem>>, vector<64x128xf32>
    tpu.vector_store %arg7[%c0_6, %c0_7], %7 {strides = array<i32>} : memref<64x128xf32, #tpu.memory_space<vmem>>, vector<64x128xf32>,
    %c0_i32_8 = arith.constant 0 : i32
    %9 = arith.cmpi eq, %arg2, %c0_i32_8 : i32
    %10 = arith.extui %9 : i1 to i32
    %c0_i32_9 = arith.constant 0 : i32
    %11 = arith.cmpi ne, %10, %c0_i32_9 : i32
    scf.if %11 {
      %c0_10 = arith.constant 0 : index
      %c0_11 = arith.constant 0 : index
      %12 = vector.load %arg7[%c0_10, %c0_11] : memref<64x128xf32, #tpu.memory_space<vmem>>, vector<64x128xf32>
      %c0_12 = arith.constant 0 : index
      %c0_13 = arith.constant 0 : index
      %13 = vector.load %arg5[%c0_12, %c0_13] : memref<1x128xf32, #tpu.memory_space<vmem>>, vector<1x128xf32>
      %14 = vector.broadcast %13 : vector<1x128xf32> to vector<64x128xf32>
      %15 = arith.addf %12, %14 : vector<64x128xf32>
      %c0_14 = arith.constant 0 : index
      %c0_15 = arith.constant 0 : index
      %16 = vector.load %arg6[%c0_14, %c0_15] : memref<64x128xf32, #tpu.memory_space<vmem>>, vector<64x128xf32>
      tpu.vector_store %arg6[%c0_14, %c0_15], %15 {strides = array<i32>} : memref<64x128xf32, #tpu.memory_space<vmem>>, vector<64x128xf32>,
    } else {
    }
    return
  }
  func.func @transform_0(%arg0: i32, %arg1: i32, %arg2: i32) -> (i32, i32) {
    %c0_i32 = arith.constant 0 : i32
    return %arg0, %arg2 : i32, i32
  }
  func.func @transform_1(%arg0: i32, %arg1: i32, %arg2: i32) -> (i32, i32) {
    %c0_i32 = arith.constant 0 : i32
    return %arg2, %arg1 : i32, i32
  }
  func.func @transform_2(%arg0: i32, %arg1: i32, %arg2: i32) -> (i32, i32) {
    %c0_i32 = arith.constant 0 : i32
    %c0_i32_0 = arith.constant 0 : i32
    return %c0_i32, %arg1 : i32, i32
  }
  func.func @transform_3(%arg0: i32, %arg1: i32, %arg2: i32) -> (i32, i32) {
    %c0_i32 = arith.constant 0 : i32
    return %arg0, %arg1 : i32, i32
  }
}

module attributes {stable_mosaic.version = 11 : i64} {
  func.func @_gru_recurrent_kernel(%arg0: i32, %arg1: i32, %arg2: memref<8x8x384xf32, #tpu.memory_space<vmem>>, %arg3: memref<8x128xf32, #tpu.memory_space<vmem>>, %arg4: memref<128x384xf32, #tpu.memory_space<vmem>>, %arg5: memref<1x128xf32, #tpu.memory_space<vmem>>, %arg6: memref<8x8x128xf32, #tpu.memory_space<vmem>>, %arg7: memref<8x128xf32, #tpu.memory_space<vmem>>) attributes {dimension_semantics = [#tpu.dimension_semantics<parallel>, #tpu.dimension_semantics<arbitrary>], iteration_bounds = array<i64: 1, 1>, scalar_prefetch = 0 : i64, scratch_operands = 1 : i64, tpu.core_type = #tpu.core_type<tc>, window_params = [{transform_indices = @transform_0, window_bounds = array<i64: 8, 8, 384>}, {transform_indices = @transform_1, window_bounds = array<i64: 8, 128>}, {pipeline_mode = #tpu.pipeline_mode<synchronous>, transform_indices = @transform_2, window_bounds = array<i64: 128, 384>}, {pipeline_mode = #tpu.pipeline_mode<synchronous>, transform_indices = @transform_3, window_bounds = array<i64: 1, 128>}, {transform_indices = @transform_4, window_bounds = array<i64: 8, 8, 128>}]} {
    %c0_i32 = arith.constant 0 : i32
    %0 = arith.cmpi eq, %arg1, %c0_i32 : i32
    %1 = arith.extui %0 : i1 to i32
    %c0_i32_0 = arith.constant 0 : i32
    %2 = arith.cmpi ne, %1, %c0_i32_0 : i32
    scf.if %2 {
      %c0_80 = arith.constant 0 : index
      %c0_81 = arith.constant 0 : index
      %265 = vector.load %arg3[%c0_80, %c0_81] : memref<8x128xf32, #tpu.memory_space<vmem>>, vector<8x128xf32>
      %c0_82 = arith.constant 0 : index
      %c0_83 = arith.constant 0 : index
      %266 = vector.load %arg7[%c0_82, %c0_83] : memref<8x128xf32, #tpu.memory_space<vmem>>, vector<8x128xf32>
      tpu.vector_store %arg7[%c0_82, %c0_83], %265 {strides = array<i32>} : memref<8x128xf32, #tpu.memory_space<vmem>>, vector<8x128xf32>,
    } else {
    }
    %c0 = arith.constant 0 : index
    %c0_1 = arith.constant 0 : index
    %3 = vector.load %arg4[%c0, %c0_1] : memref<128x384xf32, #tpu.memory_space<vmem>>, vector<128x384xf32>
    %c0_2 = arith.constant 0 : index
    %c0_3 = arith.constant 0 : index
    %4 = vector.load %arg5[%c0_2, %c0_3] : memref<1x128xf32, #tpu.memory_space<vmem>>, vector<1x128xf32>
    %5 = vector.shape_cast %4 : vector<1x128xf32> to vector<1x128xf32>
    %6 = vector.broadcast %5 : vector<1x128xf32> to vector<8x128xf32>
    %c0_4 = arith.constant 0 : index
    %c0_5 = arith.constant 0 : index
    %7 = vector.load %arg7[%c0_4, %c0_5] : memref<8x128xf32, #tpu.memory_space<vmem>>, vector<8x128xf32>
    %cst = arith.constant dense<0.000000e+00> : vector<8x384xf32>
    %8 = tpu.matmul %7, %3, %cst {dimension_numbers = #tpu.dot_dimension_numbers<[1], [0], [0], [1], [0, 0, 1, 1], [], []>} : vector<8x128xf32>, vector<128x384xf32>, vector<8x384xf32> -> vector<8x384xf32>
    %c0_6 = arith.constant 0 : index
    %c0_7 = arith.constant 0 : index
    %c0_8 = arith.constant 0 : index
    %9 = vector.load %arg2[%c0_6, %c0_7, %c0_8] : memref<8x8x384xf32, #tpu.memory_space<vmem>>, vector<1x8x384xf32>
    %10 = vector.shape_cast %9 : vector<1x8x384xf32> to vector<8x384xf32>
    %11 = vector.extract_strided_slice %10 {offsets = [0, 0], sizes = [8, 128], strides = [1, 1]} : vector<8x384xf32> to vector<8x128xf32>
    %12 = vector.extract_strided_slice %8 {offsets = [0, 0], sizes = [8, 128], strides = [1, 1]} : vector<8x384xf32> to vector<8x128xf32>
    %13 = arith.addf %11, %12 : vector<8x128xf32>
    %14 = arith.negf %13 : vector<8x128xf32>
    %15 = math.exp %14 : vector<8x128xf32>
    %cst_9 = arith.constant 1.000000e+00 : f32
    %16 = vector.broadcast %cst_9 : f32 to vector<8x128xf32>
    %17 = arith.addf %16, %15 : vector<8x128xf32>
    %18 = arith.divf %16, %17 : vector<8x128xf32>
    %19 = vector.extract_strided_slice %10 {offsets = [0, 128], sizes = [8, 128], strides = [1, 1]} : vector<8x384xf32> to vector<8x128xf32>
    %20 = vector.extract_strided_slice %8 {offsets = [0, 128], sizes = [8, 128], strides = [1, 1]} : vector<8x384xf32> to vector<8x128xf32>
    %21 = arith.addf %19, %20 : vector<8x128xf32>
    %22 = arith.negf %21 : vector<8x128xf32>
    %23 = math.exp %22 : vector<8x128xf32>
    %cst_10 = arith.constant 1.000000e+00 : f32
    %24 = vector.broadcast %cst_10 : f32 to vector<8x128xf32>
    %25 = arith.addf %24, %23 : vector<8x128xf32>
    %26 = arith.divf %24, %25 : vector<8x128xf32>
    %27 = vector.extract_strided_slice %10 {offsets = [0, 256], sizes = [8, 128], strides = [1, 1]} : vector<8x384xf32> to vector<8x128xf32>
    %28 = vector.extract_strided_slice %8 {offsets = [0, 256], sizes = [8, 128], strides = [1, 1]} : vector<8x384xf32> to vector<8x128xf32>
    %29 = arith.addf %28, %6 : vector<8x128xf32>
    %30 = arith.mulf %18, %29 : vector<8x128xf32>
    %31 = arith.addf %27, %30 : vector<8x128xf32>
    %32 = math.tanh %31 : vector<8x128xf32>
    %cst_11 = arith.constant 1.000000e+00 : f32
    %33 = vector.broadcast %cst_11 : f32 to vector<8x128xf32>
    %34 = arith.subf %33, %26 : vector<8x128xf32>
    %35 = arith.mulf %34, %32 : vector<8x128xf32>
    %36 = arith.mulf %26, %7 : vector<8x128xf32>
    %37 = arith.addf %35, %36 : vector<8x128xf32>
    %38 = vector.shape_cast %37 : vector<8x128xf32> to vector<8x1x128xf32>
    %c0_12 = arith.constant 0 : index
    %c0_13 = arith.constant 0 : index
    %c0_14 = arith.constant 0 : index
    %39 = vector.load %arg6[%c0_12, %c0_13, %c0_14] : memref<8x8x128xf32, #tpu.memory_space<vmem>>, vector<8x1x128xf32>
    tpu.vector_store %arg6[%c0_12, %c0_13, %c0_14], %38 {strides = array<i32>} : memref<8x8x128xf32, #tpu.memory_space<vmem>>, vector<8x1x128xf32>,
    %cst_15 = arith.constant dense<0.000000e+00> : vector<8x384xf32>
    %40 = tpu.matmul %37, %3, %cst_15 {dimension_numbers = #tpu.dot_dimension_numbers<[1], [0], [0], [1], [0, 0, 1, 1], [], []>} : vector<8x128xf32>, vector<128x384xf32>, vector<8x384xf32> -> vector<8x384xf32>
    %c1 = arith.constant 1 : index
    %c0_16 = arith.constant 0 : index
    %c0_17 = arith.constant 0 : index
    %41 = vector.load %arg2[%c1, %c0_16, %c0_17] : memref<8x8x384xf32, #tpu.memory_space<vmem>>, vector<1x8x384xf32>
    %42 = vector.shape_cast %41 : vector<1x8x384xf32> to vector<8x384xf32>
    %43 = vector.extract_strided_slice %42 {offsets = [0, 0], sizes = [8, 128], strides = [1, 1]} : vector<8x384xf32> to vector<8x128xf32>
    %44 = vector.extract_strided_slice %40 {offsets = [0, 0], sizes = [8, 128], strides = [1, 1]} : vector<8x384xf32> to vector<8x128xf32>
    %45 = arith.addf %43, %44 : vector<8x128xf32>
    %46 = arith.negf %45 : vector<8x128xf32>
    %47 = math.exp %46 : vector<8x128xf32>
    %cst_18 = arith.constant 1.000000e+00 : f32
    %48 = vector.broadcast %cst_18 : f32 to vector<8x128xf32>
    %49 = arith.addf %48, %47 : vector<8x128xf32>
    %50 = arith.divf %48, %49 : vector<8x128xf32>
    %51 = vector.extract_strided_slice %42 {offsets = [0, 128], sizes = [8, 128], strides = [1, 1]} : vector<8x384xf32> to vector<8x128xf32>
    %52 = vector.extract_strided_slice %40 {offsets = [0, 128], sizes = [8, 128], strides = [1, 1]} : vector<8x384xf32> to vector<8x128xf32>
    %53 = arith.addf %51, %52 : vector<8x128xf32>
    %54 = arith.negf %53 : vector<8x128xf32>
    %55 = math.exp %54 : vector<8x128xf32>
    %cst_19 = arith.constant 1.000000e+00 : f32
    %56 = vector.broadcast %cst_19 : f32 to vector<8x128xf32>
    %57 = arith.addf %56, %55 : vector<8x128xf32>
    %58 = arith.divf %56, %57 : vector<8x128xf32>
    %59 = vector.extract_strided_slice %42 {offsets = [0, 256], sizes = [8, 128], strides = [1, 1]} : vector<8x384xf32> to vector<8x128xf32>
    %60 = vector.extract_strided_slice %40 {offsets = [0, 256], sizes = [8, 128], strides = [1, 1]} : vector<8x384xf32> to vector<8x128xf32>
    %61 = arith.addf %60, %6 : vector<8x128xf32>
    %62 = arith.mulf %50, %61 : vector<8x128xf32>
    %63 = arith.addf %59, %62 : vector<8x128xf32>
    %64 = math.tanh %63 : vector<8x128xf32>
    %cst_20 = arith.constant 1.000000e+00 : f32
    %65 = vector.broadcast %cst_20 : f32 to vector<8x128xf32>
    %66 = arith.subf %65, %58 : vector<8x128xf32>
    %67 = arith.mulf %66, %64 : vector<8x128xf32>
    %68 = arith.mulf %58, %37 : vector<8x128xf32>
    %69 = arith.addf %67, %68 : vector<8x128xf32>
    %70 = vector.shape_cast %69 : vector<8x128xf32> to vector<8x1x128xf32>
    %c0_21 = arith.constant 0 : index
    %c1_22 = arith.constant 1 : index
    %c0_23 = arith.constant 0 : index
    %71 = vector.load %arg6[%c0_21, %c1_22, %c0_23] : memref<8x8x128xf32, #tpu.memory_space<vmem>>, vector<8x1x128xf32>
    tpu.vector_store %arg6[%c0_21, %c1_22, %c0_23], %70 {strides = array<i32>} : memref<8x8x128xf32, #tpu.memory_space<vmem>>, vector<8x1x128xf32>,
    %cst_24 = arith.constant dense<0.000000e+00> : vector<8x384xf32>
    %72 = tpu.matmul %69, %3, %cst_24 {dimension_numbers = #tpu.dot_dimension_numbers<[1], [0], [0], [1], [0, 0, 1, 1], [], []>} : vector<8x128xf32>, vector<128x384xf32>, vector<8x384xf32> -> vector<8x384xf32>
    %c2 = arith.constant 2 : index
    %c0_25 = arith.constant 0 : index
    %c0_26 = arith.constant 0 : index
    %73 = vector.load %arg2[%c2, %c0_25, %c0_26] : memref<8x8x384xf32, #tpu.memory_space<vmem>>, vector<1x8x384xf32>
    %74 = vector.shape_cast %73 : vector<1x8x384xf32> to vector<8x384xf32>
    %75 = vector.extract_strided_slice %74 {offsets = [0, 0], sizes = [8, 128], strides = [1, 1]} : vector<8x384xf32> to vector<8x128xf32>
    %76 = vector.extract_strided_slice %72 {offsets = [0, 0], sizes = [8, 128], strides = [1, 1]} : vector<8x384xf32> to vector<8x128xf32>
    %77 = arith.addf %75, %76 : vector<8x128xf32>
    %78 = arith.negf %77 : vector<8x128xf32>
    %79 = math.exp %78 : vector<8x128xf32>
    %cst_27 = arith.constant 1.000000e+00 : f32
    %80 = vector.broadcast %cst_27 : f32 to vector<8x128xf32>
    %81 = arith.addf %80, %79 : vector<8x128xf32>
    %82 = arith.divf %80, %81 : vector<8x128xf32>
    %83 = vector.extract_strided_slice %74 {offsets = [0, 128], sizes = [8, 128], strides = [1, 1]} : vector<8x384xf32> to vector<8x128xf32>
    %84 = vector.extract_strided_slice %72 {offsets = [0, 128], sizes = [8, 128], strides = [1, 1]} : vector<8x384xf32> to vector<8x128xf32>
    %85 = arith.addf %83, %84 : vector<8x128xf32>
    %86 = arith.negf %85 : vector<8x128xf32>
    %87 = math.exp %86 : vector<8x128xf32>
    %cst_28 = arith.constant 1.000000e+00 : f32
    %88 = vector.broadcast %cst_28 : f32 to vector<8x128xf32>
    %89 = arith.addf %88, %87 : vector<8x128xf32>
    %90 = arith.divf %88, %89 : vector<8x128xf32>
    %91 = vector.extract_strided_slice %74 {offsets = [0, 256], sizes = [8, 128], strides = [1, 1]} : vector<8x384xf32> to vector<8x128xf32>
    %92 = vector.extract_strided_slice %72 {offsets = [0, 256], sizes = [8, 128], strides = [1, 1]} : vector<8x384xf32> to vector<8x128xf32>
    %93 = arith.addf %92, %6 : vector<8x128xf32>
    %94 = arith.mulf %82, %93 : vector<8x128xf32>
    %95 = arith.addf %91, %94 : vector<8x128xf32>
    %96 = math.tanh %95 : vector<8x128xf32>
    %cst_29 = arith.constant 1.000000e+00 : f32
    %97 = vector.broadcast %cst_29 : f32 to vector<8x128xf32>
    %98 = arith.subf %97, %90 : vector<8x128xf32>
    %99 = arith.mulf %98, %96 : vector<8x128xf32>
    %100 = arith.mulf %90, %69 : vector<8x128xf32>
    %101 = arith.addf %99, %100 : vector<8x128xf32>
    %102 = vector.shape_cast %101 : vector<8x128xf32> to vector<8x1x128xf32>
    %c0_30 = arith.constant 0 : index
    %c2_31 = arith.constant 2 : index
    %c0_32 = arith.constant 0 : index
    %103 = vector.load %arg6[%c0_30, %c2_31, %c0_32] : memref<8x8x128xf32, #tpu.memory_space<vmem>>, vector<8x1x128xf32>
    tpu.vector_store %arg6[%c0_30, %c2_31, %c0_32], %102 {strides = array<i32>} : memref<8x8x128xf32, #tpu.memory_space<vmem>>, vector<8x1x128xf32>,
    %cst_33 = arith.constant dense<0.000000e+00> : vector<8x384xf32>
    %104 = tpu.matmul %101, %3, %cst_33 {dimension_numbers = #tpu.dot_dimension_numbers<[1], [0], [0], [1], [0, 0, 1, 1], [], []>} : vector<8x128xf32>, vector<128x384xf32>, vector<8x384xf32> -> vector<8x384xf32>
    %c3 = arith.constant 3 : index
    %c0_34 = arith.constant 0 : index
    %c0_35 = arith.constant 0 : index
    %105 = vector.load %arg2[%c3, %c0_34, %c0_35] : memref<8x8x384xf32, #tpu.memory_space<vmem>>, vector<1x8x384xf32>
    %106 = vector.shape_cast %105 : vector<1x8x384xf32> to vector<8x384xf32>
    %107 = vector.extract_strided_slice %106 {offsets = [0, 0], sizes = [8, 128], strides = [1, 1]} : vector<8x384xf32> to vector<8x128xf32>
    %108 = vector.extract_strided_slice %104 {offsets = [0, 0], sizes = [8, 128], strides = [1, 1]} : vector<8x384xf32> to vector<8x128xf32>
    %109 = arith.addf %107, %108 : vector<8x128xf32>
    %110 = arith.negf %109 : vector<8x128xf32>
    %111 = math.exp %110 : vector<8x128xf32>
    %cst_36 = arith.constant 1.000000e+00 : f32
    %112 = vector.broadcast %cst_36 : f32 to vector<8x128xf32>
    %113 = arith.addf %112, %111 : vector<8x128xf32>
    %114 = arith.divf %112, %113 : vector<8x128xf32>
    %115 = vector.extract_strided_slice %106 {offsets = [0, 128], sizes = [8, 128], strides = [1, 1]} : vector<8x384xf32> to vector<8x128xf32>
    %116 = vector.extract_strided_slice %104 {offsets = [0, 128], sizes = [8, 128], strides = [1, 1]} : vector<8x384xf32> to vector<8x128xf32>
    %117 = arith.addf %115, %116 : vector<8x128xf32>
    %118 = arith.negf %117 : vector<8x128xf32>
    %119 = math.exp %118 : vector<8x128xf32>
    %cst_37 = arith.constant 1.000000e+00 : f32
    %120 = vector.broadcast %cst_37 : f32 to vector<8x128xf32>
    %121 = arith.addf %120, %119 : vector<8x128xf32>
    %122 = arith.divf %120, %121 : vector<8x128xf32>
    %123 = vector.extract_strided_slice %106 {offsets = [0, 256], sizes = [8, 128], strides = [1, 1]} : vector<8x384xf32> to vector<8x128xf32>
    %124 = vector.extract_strided_slice %104 {offsets = [0, 256], sizes = [8, 128], strides = [1, 1]} : vector<8x384xf32> to vector<8x128xf32>
    %125 = arith.addf %124, %6 : vector<8x128xf32>
    %126 = arith.mulf %114, %125 : vector<8x128xf32>
    %127 = arith.addf %123, %126 : vector<8x128xf32>
    %128 = math.tanh %127 : vector<8x128xf32>
    %cst_38 = arith.constant 1.000000e+00 : f32
    %129 = vector.broadcast %cst_38 : f32 to vector<8x128xf32>
    %130 = arith.subf %129, %122 : vector<8x128xf32>
    %131 = arith.mulf %130, %128 : vector<8x128xf32>
    %132 = arith.mulf %122, %101 : vector<8x128xf32>
    %133 = arith.addf %131, %132 : vector<8x128xf32>
    %134 = vector.shape_cast %133 : vector<8x128xf32> to vector<8x1x128xf32>
    %c0_39 = arith.constant 0 : index
    %c3_40 = arith.constant 3 : index
    %c0_41 = arith.constant 0 : index
    %135 = vector.load %arg6[%c0_39, %c3_40, %c0_41] : memref<8x8x128xf32, #tpu.memory_space<vmem>>, vector<8x1x128xf32>
    tpu.vector_store %arg6[%c0_39, %c3_40, %c0_41], %134 {strides = array<i32>} : memref<8x8x128xf32, #tpu.memory_space<vmem>>, vector<8x1x128xf32>,
    %cst_42 = arith.constant dense<0.000000e+00> : vector<8x384xf32>
    %136 = tpu.matmul %133, %3, %cst_42 {dimension_numbers = #tpu.dot_dimension_numbers<[1], [0], [0], [1], [0, 0, 1, 1], [], []>} : vector<8x128xf32>, vector<128x384xf32>, vector<8x384xf32> -> vector<8x384xf32>
    %c4 = arith.constant 4 : index
    %c0_43 = arith.constant 0 : index
    %c0_44 = arith.constant 0 : index
    %137 = vector.load %arg2[%c4, %c0_43, %c0_44] : memref<8x8x384xf32, #tpu.memory_space<vmem>>, vector<1x8x384xf32>
    %138 = vector.shape_cast %137 : vector<1x8x384xf32> to vector<8x384xf32>
    %139 = vector.extract_strided_slice %138 {offsets = [0, 0], sizes = [8, 128], strides = [1, 1]} : vector<8x384xf32> to vector<8x128xf32>
    %140 = vector.extract_strided_slice %136 {offsets = [0, 0], sizes = [8, 128], strides = [1, 1]} : vector<8x384xf32> to vector<8x128xf32>
    %141 = arith.addf %139, %140 : vector<8x128xf32>
    %142 = arith.negf %141 : vector<8x128xf32>
    %143 = math.exp %142 : vector<8x128xf32>
    %cst_45 = arith.constant 1.000000e+00 : f32
    %144 = vector.broadcast %cst_45 : f32 to vector<8x128xf32>
    %145 = arith.addf %144, %143 : vector<8x128xf32>
    %146 = arith.divf %144, %145 : vector<8x128xf32>
    %147 = vector.extract_strided_slice %138 {offsets = [0, 128], sizes = [8, 128], strides = [1, 1]} : vector<8x384xf32> to vector<8x128xf32>
    %148 = vector.extract_strided_slice %136 {offsets = [0, 128], sizes = [8, 128], strides = [1, 1]} : vector<8x384xf32> to vector<8x128xf32>
    %149 = arith.addf %147, %148 : vector<8x128xf32>
    %150 = arith.negf %149 : vector<8x128xf32>
    %151 = math.exp %150 : vector<8x128xf32>
    %cst_46 = arith.constant 1.000000e+00 : f32
    %152 = vector.broadcast %cst_46 : f32 to vector<8x128xf32>
    %153 = arith.addf %152, %151 : vector<8x128xf32>
    %154 = arith.divf %152, %153 : vector<8x128xf32>
    %155 = vector.extract_strided_slice %138 {offsets = [0, 256], sizes = [8, 128], strides = [1, 1]} : vector<8x384xf32> to vector<8x128xf32>
    %156 = vector.extract_strided_slice %136 {offsets = [0, 256], sizes = [8, 128], strides = [1, 1]} : vector<8x384xf32> to vector<8x128xf32>
    %157 = arith.addf %156, %6 : vector<8x128xf32>
    %158 = arith.mulf %146, %157 : vector<8x128xf32>
    %159 = arith.addf %155, %158 : vector<8x128xf32>
    %160 = math.tanh %159 : vector<8x128xf32>
    %cst_47 = arith.constant 1.000000e+00 : f32
    %161 = vector.broadcast %cst_47 : f32 to vector<8x128xf32>
    %162 = arith.subf %161, %154 : vector<8x128xf32>
    %163 = arith.mulf %162, %160 : vector<8x128xf32>
    %164 = arith.mulf %154, %133 : vector<8x128xf32>
    %165 = arith.addf %163, %164 : vector<8x128xf32>
    %166 = vector.shape_cast %165 : vector<8x128xf32> to vector<8x1x128xf32>
    %c0_48 = arith.constant 0 : index
    %c4_49 = arith.constant 4 : index
    %c0_50 = arith.constant 0 : index
    %167 = vector.load %arg6[%c0_48, %c4_49, %c0_50] : memref<8x8x128xf32, #tpu.memory_space<vmem>>, vector<8x1x128xf32>
    tpu.vector_store %arg6[%c0_48, %c4_49, %c0_50], %166 {strides = array<i32>} : memref<8x8x128xf32, #tpu.memory_space<vmem>>, vector<8x1x128xf32>,
    %cst_51 = arith.constant dense<0.000000e+00> : vector<8x384xf32>
    %168 = tpu.matmul %165, %3, %cst_51 {dimension_numbers = #tpu.dot_dimension_numbers<[1], [0], [0], [1], [0, 0, 1, 1], [], []>} : vector<8x128xf32>, vector<128x384xf32>, vector<8x384xf32> -> vector<8x384xf32>
    %c5 = arith.constant 5 : index
    %c0_52 = arith.constant 0 : index
    %c0_53 = arith.constant 0 : index
    %169 = vector.load %arg2[%c5, %c0_52, %c0_53] : memref<8x8x384xf32, #tpu.memory_space<vmem>>, vector<1x8x384xf32>
    %170 = vector.shape_cast %169 : vector<1x8x384xf32> to vector<8x384xf32>
    %171 = vector.extract_strided_slice %170 {offsets = [0, 0], sizes = [8, 128], strides = [1, 1]} : vector<8x384xf32> to vector<8x128xf32>
    %172 = vector.extract_strided_slice %168 {offsets = [0, 0], sizes = [8, 128], strides = [1, 1]} : vector<8x384xf32> to vector<8x128xf32>
    %173 = arith.addf %171, %172 : vector<8x128xf32>
    %174 = arith.negf %173 : vector<8x128xf32>
    %175 = math.exp %174 : vector<8x128xf32>
    %cst_54 = arith.constant 1.000000e+00 : f32
    %176 = vector.broadcast %cst_54 : f32 to vector<8x128xf32>
    %177 = arith.addf %176, %175 : vector<8x128xf32>
    %178 = arith.divf %176, %177 : vector<8x128xf32>
    %179 = vector.extract_strided_slice %170 {offsets = [0, 128], sizes = [8, 128], strides = [1, 1]} : vector<8x384xf32> to vector<8x128xf32>
    %180 = vector.extract_strided_slice %168 {offsets = [0, 128], sizes = [8, 128], strides = [1, 1]} : vector<8x384xf32> to vector<8x128xf32>
    %181 = arith.addf %179, %180 : vector<8x128xf32>
    %182 = arith.negf %181 : vector<8x128xf32>
    %183 = math.exp %182 : vector<8x128xf32>
    %cst_55 = arith.constant 1.000000e+00 : f32
    %184 = vector.broadcast %cst_55 : f32 to vector<8x128xf32>
    %185 = arith.addf %184, %183 : vector<8x128xf32>
    %186 = arith.divf %184, %185 : vector<8x128xf32>
    %187 = vector.extract_strided_slice %170 {offsets = [0, 256], sizes = [8, 128], strides = [1, 1]} : vector<8x384xf32> to vector<8x128xf32>
    %188 = vector.extract_strided_slice %168 {offsets = [0, 256], sizes = [8, 128], strides = [1, 1]} : vector<8x384xf32> to vector<8x128xf32>
    %189 = arith.addf %188, %6 : vector<8x128xf32>
    %190 = arith.mulf %178, %189 : vector<8x128xf32>
    %191 = arith.addf %187, %190 : vector<8x128xf32>
    %192 = math.tanh %191 : vector<8x128xf32>
    %cst_56 = arith.constant 1.000000e+00 : f32
    %193 = vector.broadcast %cst_56 : f32 to vector<8x128xf32>
    %194 = arith.subf %193, %186 : vector<8x128xf32>
    %195 = arith.mulf %194, %192 : vector<8x128xf32>
    %196 = arith.mulf %186, %165 : vector<8x128xf32>
    %197 = arith.addf %195, %196 : vector<8x128xf32>
    %198 = vector.shape_cast %197 : vector<8x128xf32> to vector<8x1x128xf32>
    %c0_57 = arith.constant 0 : index
    %c5_58 = arith.constant 5 : index
    %c0_59 = arith.constant 0 : index
    %199 = vector.load %arg6[%c0_57, %c5_58, %c0_59] : memref<8x8x128xf32, #tpu.memory_space<vmem>>, vector<8x1x128xf32>
    tpu.vector_store %arg6[%c0_57, %c5_58, %c0_59], %198 {strides = array<i32>} : memref<8x8x128xf32, #tpu.memory_space<vmem>>, vector<8x1x128xf32>,
    %cst_60 = arith.constant dense<0.000000e+00> : vector<8x384xf32>
    %200 = tpu.matmul %197, %3, %cst_60 {dimension_numbers = #tpu.dot_dimension_numbers<[1], [0], [0], [1], [0, 0, 1, 1], [], []>} : vector<8x128xf32>, vector<128x384xf32>, vector<8x384xf32> -> vector<8x384xf32>
    %c6 = arith.constant 6 : index
    %c0_61 = arith.constant 0 : index
    %c0_62 = arith.constant 0 : index
    %201 = vector.load %arg2[%c6, %c0_61, %c0_62] : memref<8x8x384xf32, #tpu.memory_space<vmem>>, vector<1x8x384xf32>
    %202 = vector.shape_cast %201 : vector<1x8x384xf32> to vector<8x384xf32>
    %203 = vector.extract_strided_slice %202 {offsets = [0, 0], sizes = [8, 128], strides = [1, 1]} : vector<8x384xf32> to vector<8x128xf32>
    %204 = vector.extract_strided_slice %200 {offsets = [0, 0], sizes = [8, 128], strides = [1, 1]} : vector<8x384xf32> to vector<8x128xf32>
    %205 = arith.addf %203, %204 : vector<8x128xf32>
    %206 = arith.negf %205 : vector<8x128xf32>
    %207 = math.exp %206 : vector<8x128xf32>
    %cst_63 = arith.constant 1.000000e+00 : f32
    %208 = vector.broadcast %cst_63 : f32 to vector<8x128xf32>
    %209 = arith.addf %208, %207 : vector<8x128xf32>
    %210 = arith.divf %208, %209 : vector<8x128xf32>
    %211 = vector.extract_strided_slice %202 {offsets = [0, 128], sizes = [8, 128], strides = [1, 1]} : vector<8x384xf32> to vector<8x128xf32>
    %212 = vector.extract_strided_slice %200 {offsets = [0, 128], sizes = [8, 128], strides = [1, 1]} : vector<8x384xf32> to vector<8x128xf32>
    %213 = arith.addf %211, %212 : vector<8x128xf32>
    %214 = arith.negf %213 : vector<8x128xf32>
    %215 = math.exp %214 : vector<8x128xf32>
    %cst_64 = arith.constant 1.000000e+00 : f32
    %216 = vector.broadcast %cst_64 : f32 to vector<8x128xf32>
    %217 = arith.addf %216, %215 : vector<8x128xf32>
    %218 = arith.divf %216, %217 : vector<8x128xf32>
    %219 = vector.extract_strided_slice %202 {offsets = [0, 256], sizes = [8, 128], strides = [1, 1]} : vector<8x384xf32> to vector<8x128xf32>
    %220 = vector.extract_strided_slice %200 {offsets = [0, 256], sizes = [8, 128], strides = [1, 1]} : vector<8x384xf32> to vector<8x128xf32>
    %221 = arith.addf %220, %6 : vector<8x128xf32>
    %222 = arith.mulf %210, %221 : vector<8x128xf32>
    %223 = arith.addf %219, %222 : vector<8x128xf32>
    %224 = math.tanh %223 : vector<8x128xf32>
    %cst_65 = arith.constant 1.000000e+00 : f32
    %225 = vector.broadcast %cst_65 : f32 to vector<8x128xf32>
    %226 = arith.subf %225, %218 : vector<8x128xf32>
    %227 = arith.mulf %226, %224 : vector<8x128xf32>
    %228 = arith.mulf %218, %197 : vector<8x128xf32>
    %229 = arith.addf %227, %228 : vector<8x128xf32>
    %230 = vector.shape_cast %229 : vector<8x128xf32> to vector<8x1x128xf32>
    %c0_66 = arith.constant 0 : index
    %c6_67 = arith.constant 6 : index
    %c0_68 = arith.constant 0 : index
    %231 = vector.load %arg6[%c0_66, %c6_67, %c0_68] : memref<8x8x128xf32, #tpu.memory_space<vmem>>, vector<8x1x128xf32>
    tpu.vector_store %arg6[%c0_66, %c6_67, %c0_68], %230 {strides = array<i32>} : memref<8x8x128xf32, #tpu.memory_space<vmem>>, vector<8x1x128xf32>,
    %cst_69 = arith.constant dense<0.000000e+00> : vector<8x384xf32>
    %232 = tpu.matmul %229, %3, %cst_69 {dimension_numbers = #tpu.dot_dimension_numbers<[1], [0], [0], [1], [0, 0, 1, 1], [], []>} : vector<8x128xf32>, vector<128x384xf32>, vector<8x384xf32> -> vector<8x384xf32>
    %c7 = arith.constant 7 : index
    %c0_70 = arith.constant 0 : index
    %c0_71 = arith.constant 0 : index
    %233 = vector.load %arg2[%c7, %c0_70, %c0_71] : memref<8x8x384xf32, #tpu.memory_space<vmem>>, vector<1x8x384xf32>
    %234 = vector.shape_cast %233 : vector<1x8x384xf32> to vector<8x384xf32>
    %235 = vector.extract_strided_slice %234 {offsets = [0, 0], sizes = [8, 128], strides = [1, 1]} : vector<8x384xf32> to vector<8x128xf32>
    %236 = vector.extract_strided_slice %232 {offsets = [0, 0], sizes = [8, 128], strides = [1, 1]} : vector<8x384xf32> to vector<8x128xf32>
    %237 = arith.addf %235, %236 : vector<8x128xf32>
    %238 = arith.negf %237 : vector<8x128xf32>
    %239 = math.exp %238 : vector<8x128xf32>
    %cst_72 = arith.constant 1.000000e+00 : f32
    %240 = vector.broadcast %cst_72 : f32 to vector<8x128xf32>
    %241 = arith.addf %240, %239 : vector<8x128xf32>
    %242 = arith.divf %240, %241 : vector<8x128xf32>
    %243 = vector.extract_strided_slice %234 {offsets = [0, 128], sizes = [8, 128], strides = [1, 1]} : vector<8x384xf32> to vector<8x128xf32>
    %244 = vector.extract_strided_slice %232 {offsets = [0, 128], sizes = [8, 128], strides = [1, 1]} : vector<8x384xf32> to vector<8x128xf32>
    %245 = arith.addf %243, %244 : vector<8x128xf32>
    %246 = arith.negf %245 : vector<8x128xf32>
    %247 = math.exp %246 : vector<8x128xf32>
    %cst_73 = arith.constant 1.000000e+00 : f32
    %248 = vector.broadcast %cst_73 : f32 to vector<8x128xf32>
    %249 = arith.addf %248, %247 : vector<8x128xf32>
    %250 = arith.divf %248, %249 : vector<8x128xf32>
    %251 = vector.extract_strided_slice %234 {offsets = [0, 256], sizes = [8, 128], strides = [1, 1]} : vector<8x384xf32> to vector<8x128xf32>
    %252 = vector.extract_strided_slice %232 {offsets = [0, 256], sizes = [8, 128], strides = [1, 1]} : vector<8x384xf32> to vector<8x128xf32>
    %253 = arith.addf %252, %6 : vector<8x128xf32>
    %254 = arith.mulf %242, %253 : vector<8x128xf32>
    %255 = arith.addf %251, %254 : vector<8x128xf32>
    %256 = math.tanh %255 : vector<8x128xf32>
    %cst_74 = arith.constant 1.000000e+00 : f32
    %257 = vector.broadcast %cst_74 : f32 to vector<8x128xf32>
    %258 = arith.subf %257, %250 : vector<8x128xf32>
    %259 = arith.mulf %258, %256 : vector<8x128xf32>
    %260 = arith.mulf %250, %229 : vector<8x128xf32>
    %261 = arith.addf %259, %260 : vector<8x128xf32>
    %262 = vector.shape_cast %261 : vector<8x128xf32> to vector<8x1x128xf32>
    %c0_75 = arith.constant 0 : index
    %c7_76 = arith.constant 7 : index
    %c0_77 = arith.constant 0 : index
    %263 = vector.load %arg6[%c0_75, %c7_76, %c0_77] : memref<8x8x128xf32, #tpu.memory_space<vmem>>, vector<8x1x128xf32>
    tpu.vector_store %arg6[%c0_75, %c7_76, %c0_77], %262 {strides = array<i32>} : memref<8x8x128xf32, #tpu.memory_space<vmem>>, vector<8x1x128xf32>,
    %c0_78 = arith.constant 0 : index
    %c0_79 = arith.constant 0 : index
    %264 = vector.load %arg7[%c0_78, %c0_79] : memref<8x128xf32, #tpu.memory_space<vmem>>, vector<8x128xf32>
    tpu.vector_store %arg7[%c0_78, %c0_79], %261 {strides = array<i32>} : memref<8x128xf32, #tpu.memory_space<vmem>>, vector<8x128xf32>,
    return
  }
  func.func @transform_0(%arg0: i32, %arg1: i32) -> (i32, i32, i32) {
    %c0_i32 = arith.constant 0 : i32
    %c0_i32_0 = arith.constant 0 : i32
    return %arg1, %arg0, %c0_i32 : i32, i32, i32
  }
  func.func @transform_1(%arg0: i32, %arg1: i32) -> (i32, i32) {
    %c0_i32 = arith.constant 0 : i32
    %c0_i32_0 = arith.constant 0 : i32
    return %arg0, %c0_i32 : i32, i32
  }
  func.func @transform_2(%arg0: i32, %arg1: i32) -> (i32, i32) {
    %c0_i32 = arith.constant 0 : i32
    %c0_i32_0 = arith.constant 0 : i32
    %c0_i32_1 = arith.constant 0 : i32
    return %c0_i32, %c0_i32_0 : i32, i32
  }
  func.func @transform_3(%arg0: i32, %arg1: i32) -> (i32, i32) {
    %c0_i32 = arith.constant 0 : i32
    %c0_i32_0 = arith.constant 0 : i32
    %c0_i32_1 = arith.constant 0 : i32
    return %c0_i32, %c0_i32_0 : i32, i32
  }
  func.func @transform_4(%arg0: i32, %arg1: i32) -> (i32, i32, i32) {
    %c0_i32 = arith.constant 0 : i32
    %c0_i32_0 = arith.constant 0 : i32
    return %arg0, %arg1, %c0_i32 : i32, i32, i32
  }
}

</mosaic_0001>

<llo_original>
// kernel: policy_network_forward.3
$region0: #{policy_network_forward.3}
  #allocation0 [shape = 'u32[]', space=smem, size = 0x4, offset = 0x4, fixed_abs, tag = 'smem constant byte address 0x4 - core index']
  #allocation1 [shape = 'u32[72,128]{1,0:T(1,128)}', space=vmem, size = 0x9000, scoped, tag = 'internal scratch']
  #allocation2 [shape = 'f32[64,128]{1,0:T(8,128)}', space=vmem, size = 0x8000, scoped, tag = 'scratch operand']
  %s0 = inlined_call_operand.vmem [shape: f32[64,128], index: 0, kind: input, shape index: {}]
  %s1 = inlined_call_operand.vmem [shape: f32[128,384], index: 1, kind: input, shape index: {}]
  %s2 = inlined_call_operand.vmem [shape: f32[1,384], index: 2, kind: input, shape index: {}]
  %s3 = inlined_call_operand.vmem [shape: f32[64,384], index: 3, kind: output, shape index: {}]
  %s4 = sld [smem:[#allocation0]]
  $region125: #{policy_network_forward.3} parent=0
    _
  %s6 = ssub.s32 1, %s4
  %s7 = scalar_select 0, %s6, %s4
  $region1: #{policy_network_forward.3} parent=0
    #allocation3 [shape = 'u8[131072]{0}', space=vmem, size = 0x20000, scoped, tag = 'input window, operand 1']
    #allocation4 [shape = 'u8[65536]{0}', space=vmem, size = 0x10000, scoped, tag = 'output window, operand 0']
    loop: start=0, step=1, limit=5
    $region2: #{policy_network_forward.3} parent=1 // loop_pre_header
      _
    $region3: #{policy_network_forward.3} parent=1 // loop_header
      %s9 = sphi 0, %s13
      %p10 = scmp.ge.s32.totalorder %s9, 5
      %s16 = sphi 0, %s35
      %s17 = sphi 0, %s31
      %s18 = sphi 0, %s27
      %s19 = sphi 0, %s16
      %s20 = sphi 0, %s17
      %s21 = sphi 0, %s18
      %s22 = sphi 0, %s19
      %s23 = sphi 0, %s20
      %s24 = sphi 0, %s21
      %s40 = sphi 0, %s42
      %s43 = sphi 0, %s40
      %s44 = sphi 0, %s43
      %s60 = sphi 0, %s44
      %s68 = sphi 0, %s70
      %s71 = sphi 0, %s68
      %s72 = sphi 0, %s71
      %s88 = sphi 0, %s72
      %s94 = sphi 0, %s96
      %s97 = sphi 0, %s94
      %s98 = sphi 0, %s97
      %s114 = sphi 0, %s98
      %s122 = sphi 0, %s124
      %s125 = sphi 0, %s122
      %s126 = sphi 0, %s125
      %s142 = sphi 0, %s126
    $region4: #{policy_network_forward.3} parent=1 // loop_header_branch
      %12 = sbr.rel (%p10) target = $region8
    $region5: #{policy_network_forward.3} parent=1 // loop_body
      %s14 = ssub.s32 %s9, 1
      %s15 = ssub.s32 %s9, 2
      %s25 = sadd.s32 1, %s18
      %p26 = scmp.ge.s32.totalorder %s25, 1
      %s27 = scalar_select %p26, 0, %s25
      %s28 = sadd.s32 1, %s17
      %s29 = scalar_select %p26, %s28, %s17
      %p30 = scmp.ge.s32.totalorder %s29, 3
      %s31 = scalar_select %p30, 0, %s29
      %s32 = sadd.s32 1, %s16
      %s33 = scalar_select %p30, %s32, %s16
      %p34 = scmp.ge.s32.totalorder %s33, 1
      %s35 = scalar_select %p34, 0, %s33
      %s36 = ssub.s32 %s16, %s35
      %s37 = ssub.s32 %s18, %s27
      %s38 = sor.u32 %s36, %s37
      %p39 = scmp.eq.s32.totalorder %s38, 0
      %s41 = sadd.s32 %s40, 1
      %s42 = scalar_select %p39, %s40, %s41
      %p45 = pneg %p39
      %p46 = scmp.eq.s32.totalorder %s9, 2
      %p47 = por %p45, %p46
      %p48 = scmp.ne.s32.totalorder %s40, %s43
      %p49 = scmp.eq.s32.totalorder %s9, 0
      %p50 = por %p48, %p49
      %p51 = scmp.ne.s32.totalorder %s40, %s43
      %p52 = scmp.eq.s32.totalorder %s14, 2
      %p53 = por %p51, %p52
      %p54 = scmp.ne.s32.totalorder %s43, %s44
      %p55 = scmp.eq.s32.totalorder %s14, 0
      %p56 = por %p54, %p55
      %p57 = scmp.ne.s32.totalorder %s43, %s44
      %p58 = scmp.eq.s32.totalorder %s15, 2
      %p59 = por %p57, %p58
      %p61 = scmp.ne.s32.totalorder %s44, %s60
      %p62 = scmp.eq.s32.totalorder %s15, 0
      %p63 = por %p61, %p62
      %s64 = ssub.s32 %s18, %s27
      %s65 = ssub.s32 %s17, %s31
      %s66 = sor.u32 %s64, %s65
      %p67 = scmp.eq.s32.totalorder %s66, 0
      %s69 = sadd.s32 %s68, 1
      %s70 = scalar_select %p67, %s68, %s69
      %p73 = pneg %p67
      %p74 = scmp.eq.s32.totalorder %s9, 2
      %p75 = por %p73, %p74
      %p76 = scmp.ne.s32.totalorder %s68, %s71
      %p77 = scmp.eq.s32.totalorder %s9, 0
      %p78 = por %p76, %p77
      %p79 = scmp.ne.s32.totalorder %s68, %s71
      %p80 = scmp.eq.s32.totalorder %s14, 2
      %p81 = por %p79, %p80
      %p82 = scmp.ne.s32.totalorder %s71, %s72
      %p83 = scmp.eq.s32.totalorder %s14, 0
      %p84 = por %p82, %p83
      %p85 = scmp.ne.s32.totalorder %s71, %s72
      %p86 = scmp.eq.s32.totalorder %s15, 2
      %p87 = por %p85, %p86
      %p89 = scmp.ne.s32.totalorder %s72, %s88
      %p90 = scmp.eq.s32.totalorder %s15, 0
      %p91 = por %p89, %p90
      %s92 = ssub.s32 %s17, %s31
      %p93 = scmp.eq.s32.totalorder %s92, 0
      %s95 = sadd.s32 %s94, 1
      %s96 = scalar_select %p93, %s94, %s95
      %p99 = pneg %p93
      %p100 = scmp.eq.s32.totalorder %s9, 2
      %p101 = por %p99, %p100
      %p102 = scmp.ne.s32.totalorder %s94, %s97
      %p103 = scmp.eq.s32.totalorder %s9, 0
      %p104 = por %p102, %p103
      %p105 = scmp.ne.s32.totalorder %s94, %s97
      %p106 = scmp.eq.s32.totalorder %s14, 2
      %p107 = por %p105, %p106
      %p108 = scmp.ne.s32.totalorder %s97, %s98
      %p109 = scmp.eq.s32.totalorder %s14, 0
      %p110 = por %p108, %p109
      %p111 = scmp.ne.s32.totalorder %s97, %s98
      %p112 = scmp.eq.s32.totalorder %s15, 2
      %p113 = por %p111, %p112
      %p115 = scmp.ne.s32.totalorder %s98, %s114
      %p116 = scmp.eq.s32.totalorder %s15, 0
      %p117 = por %p115, %p116
      %s118 = ssub.s32 %s16, %s35
      %s119 = ssub.s32 %s17, %s31
      %s120 = sor.u32 %s118, %s119
      %p121 = scmp.eq.s32.totalorder %s120, 0
      %s123 = sadd.s32 %s122, 1
      %s124 = scalar_select %p121, %s122, %s123
      %p127 = pneg %p121
      %p128 = scmp.eq.s32.totalorder %s9, 2
      %p129 = por %p127, %p128
      %p130 = scmp.ne.s32.totalorder %s122, %s125
      %p131 = scmp.eq.s32.totalorder %s9, 0
      %p132 = por %p130, %p131
      %p133 = scmp.ne.s32.totalorder %s122, %s125
      %p134 = scmp.eq.s32.totalorder %s14, 2
      %p135 = por %p133, %p134
      %p136 = scmp.ne.s32.totalorder %s125, %s126
      %p137 = scmp.eq.s32.totalorder %s14, 0
      %p138 = por %p136, %p137
      %p139 = scmp.ne.s32.totalorder %s125, %s126
      %p140 = scmp.eq.s32.totalorder %s15, 2
      %p141 = por %p139, %p140
      %p143 = scmp.ne.s32.totalorder %s126, %s142
      %p144 = scmp.eq.s32.totalorder %s15, 0
      %p145 = por %p143, %p144
      %p146 = scmp.le.s32.totalorder 1, %s9
      %p147 = scmp.lt.s32.totalorder %s9, 4
      %p148 = pnand %p146, %p147
      %p149 = pneg %p148
      // Predicated region
      $region9: #{policy_network_forward.3} parent=5 // pred_check
        _
      $region10: #{policy_network_forward.3} parent=5 // pred_check_branch
        %151 = sbr.rel (%p148) target = $region12
      $region11: #{policy_network_forward.3} parent=5 // pred_region
        %s152 = ssub.s32 %s9, 1
        // Predicated region
        $region13: #{policy_network_forward.3} parent=11 // pred_check
          %p153 = pneg %p56
        $region14: #{policy_network_forward.3} parent=11 // pred_check_branch
          %155 = sbr.rel (%p153) target = $region16
        $region15: #{policy_network_forward.3} parent=11 // pred_region
          %s156 = smul.u32 8, %s19
          %p157 = scmp.lt.s32.totalorder %s156, 7
          %s158 = scalar_select %p157, %s156, 7
          %p159 = scmp.lt.s32.totalorder %s21, 0
          %s160 = scalar_select %p159, %s21, 0
          %s161 = sadd.s32 %s160, %s158
          %s162 = smul.addr %s161, 8
          %s163 = scalar_lea.vmem %s0, %s162
          %s164 = smul.u32 8, %s19
        $region16: #{policy_network_forward.3} parent=11 // pred_fallthru
          _
      $region12: #{policy_network_forward.3} parent=5 // pred_fallthru
        _
      %p165 = scmp.lt.s32.totalorder %s9, 3
      // Predicated region
      $region17: #{policy_network_forward.3} parent=5 // pred_check
        %p166 = pneg %p165
      $region18: #{policy_network_forward.3} parent=5 // pred_check_branch
        %168 = sbr.rel (%p166) target = $region20
      $region19: #{policy_network_forward.3} parent=5 // pred_region
        // Predicated region
        $region21: #{policy_network_forward.3} parent=19 // pred_check
          %p169 = pneg %p78
        $region22: #{policy_network_forward.3} parent=19 // pred_check_branch
          %171 = sbr.rel (%p169) target = $region24
        $region23: #{policy_network_forward.3} parent=19 // pred_region
          %s172 = sand.u32 %s68, 1
          %s173 = sand.u32 %s68, 1
          %s174 = smul.addr %s173, 128
          %s175 = scalar_lea.vmem [#allocation3], %s174
          %s176 = smul.u32 16, %s18
          %s177 = smul.addr %s176, 3
          %s178 = sadd.s32 %s17, %s177
          %s179 = smul.addr %s178, 8
          %s180 = scalar_lea.vmem %s1, %s179
          // Predicated region
          $region25: #{policy_network_forward.3} parent=23 // pred_check
            _
          $region26: #{policy_network_forward.3} parent=23 // pred_check_branch
            %182 = sbr.rel (0) target = $region28
          $region27: #{policy_network_forward.3} parent=23 // pred_region
            // Predicated region
            $region29: #{policy_network_forward.3} parent=27 // pred_check
              _
            $region30: #{policy_network_forward.3} parent=27 // pred_check_branch
              %184 = sbr.rel (0) target = $region32
            $region31: #{policy_network_forward.3} parent=27 // pred_region
              // Predicated region
              $region44: #{policy_network_forward.3} parent=31 // pred_check
                _
              $region45: #{policy_network_forward.3} parent=31 // pred_check_branch
                %230 = sbr.rel (0) target = $region47
              $region46: #{policy_network_forward.3} parent=31 // pred_region
                loop: start=0, step=1, limit=1
                $region48: #{policy_network_forward.3} parent=46 // loop_pre_header
                  _
                $region49: #{policy_network_forward.3} parent=46 // loop_header
                  %s232 = sphi 0, %s236
                  %p233 = scmp.ge.s32.totalorder %s232, 1
                  %s237 = sphi %s180, %s180
                  %s238 = sphi %s175, %s175
                $region50: #{policy_network_forward.3} parent=46 // loop_header_branch
                  %235 = sbr.rel (%p233) target = $region54
                $region51: #{policy_network_forward.3} parent=46 // loop_body
                  %v239 = vld [vmem:[%s237] sm:$0xff]
                  %240 = vst [vmem:[%s238] sm:$0xff] %v239
                  %v241 = vld [vmem:[%s237 + $0x18] sm:$0xff]
                  %242 = vst [vmem:[%s238 + $0x8] sm:$0xff] %v241
                  %v243 = vld [vmem:[%s237 + $0x30] sm:$0xff]
                  %244 = vst [vmem:[%s238 + $0x10] sm:$0xff] %v243
                  %v245 = vld [vmem:[%s237 + $0x48] sm:$0xff]
                  %246 = vst [vmem:[%s238 + $0x18] sm:$0xff] %v245
                  %v247 = vld [vmem:[%s237 + $0x60] sm:$0xff]
                  %248 = vst [vmem:[%s238 + $0x20] sm:$0xff] %v247
                  %v249 = vld [vmem:[%s237 + $0x78] sm:$0xff]
                  %250 = vst [vmem:[%s238 + $0x28] sm:$0xff] %v249
                  %v251 = vld [vmem:[%s237 + $0x90] sm:$0xff]
                  %252 = vst [vmem:[%s238 + $0x30] sm:$0xff] %v251
                  %v253 = vld [vmem:[%s237 + $0xa8] sm:$0xff]
                  %254 = vst [vmem:[%s238 + $0x38] sm:$0xff] %v253
                  %v255 = vld [vmem:[%s237 + $0xc0] sm:$0xff]
                  %256 = vst [vmem:[%s238 + $0x40] sm:$0xff] %v255
                  %v257 = vld [vmem:[%s237 + $0xd8] sm:$0xff]
                  %258 = vst [vmem:[%s238 + $0x48] sm:$0xff] %v257
                  %v259 = vld [vmem:[%s237 + $0xf0] sm:$0xff]
                  %260 = vst [vmem:[%s238 + $0x50] sm:$0xff] %v259
                  %v261 = vld [vmem:[%s237 + $0x108] sm:$0xff]
                  %262 = vst [vmem:[%s238 + $0x58] sm:$0xff] %v261
                  %v263 = vld [vmem:[%s237 + $0x120] sm:$0xff]
                  %264 = vst [vmem:[%s238 + $0x60] sm:$0xff] %v263
                  %v265 = vld [vmem:[%s237 + $0x138] sm:$0xff]
                  %266 = vst [vmem:[%s238 + $0x68] sm:$0xff] %v265
                  %v267 = vld [vmem:[%s237 + $0x150] sm:$0xff]
                  %268 = vst [vmem:[%s238 + $0x70] sm:$0xff] %v267
                  %v269 = vld [vmem:[%s237 + $0x168] sm:$0xff]
                  %270 = vst [vmem:[%s238 + $0x78] sm:$0xff] %v269
                $region52: #{policy_network_forward.3} parent=46 // loop_footer
                  %s236 = sadd.s32 1, %s232
                $region53: #{policy_network_forward.3} parent=46 // loop_footer_branch
                  %231 = sbr.rel target = $region49
                $region54: #{policy_network_forward.3} parent=46 // loop_exit
                  _
              $region47: #{policy_network_forward.3} parent=31 // pred_fallthru
                _
              // Predicated region
              $region55: #{policy_network_forward.3} parent=31 // pred_check
                _
              $region56: #{policy_network_forward.3} parent=31 // pred_check_branch
                %272 = sbr.rel target = $region58
              $region57: #{policy_network_forward.3} parent=31 // pred_region
                _
              $region58: #{policy_network_forward.3} parent=31 // pred_fallthru
                _
            $region32: #{policy_network_forward.3} parent=27 // pred_fallthru
              _
            // Predicated region
            $region33: #{policy_network_forward.3} parent=27 // pred_check
              _
            $region34: #{policy_network_forward.3} parent=27 // pred_check_branch
              %186 = sbr.rel target = $region36
            $region35: #{policy_network_forward.3} parent=27 // pred_region
              %s188 = ssub.s32 256, 1
              loop: start=0, step=1, limit=1
              $region37: #{policy_network_forward.3} parent=35 // loop_pre_header
                _
              $region38: #{policy_network_forward.3} parent=35 // loop_header
                %s190 = sphi 0, %s194
                %p191 = scmp.ge.s32.totalorder %s190, 1
                %s195 = sphi %s180, %s180
                %s196 = sphi %s175, %s175
              $region39: #{policy_network_forward.3} parent=35 // loop_header_branch
                %193 = sbr.rel (%p191) target = $region43
              $region40: #{policy_network_forward.3} parent=35 // loop_body
                %v197 = vld [vmem:[%s195] sm:%s188]
                %198 = vst [vmem:[%s196] sm:%s188] %v197
                %v199 = vld [vmem:[%s195 + $0x18] sm:%s188]
                %200 = vst [vmem:[%s196 + $0x8] sm:%s188] %v199
                %v201 = vld [vmem:[%s195 + $0x30] sm:%s188]
                %202 = vst [vmem:[%s196 + $0x10] sm:%s188] %v201
                %v203 = vld [vmem:[%s195 + $0x48] sm:%s188]
                %204 = vst [vmem:[%s196 + $0x18] sm:%s188] %v203
                %v205 = vld [vmem:[%s195 + $0x60] sm:%s188]
                %206 = vst [vmem:[%s196 + $0x20] sm:%s188] %v205
                %v207 = vld [vmem:[%s195 + $0x78] sm:%s188]
                %208 = vst [vmem:[%s196 + $0x28] sm:%s188] %v207
                %v209 = vld [vmem:[%s195 + $0x90] sm:%s188]
                %210 = vst [vmem:[%s196 + $0x30] sm:%s188] %v209
                %v211 = vld [vmem:[%s195 + $0xa8] sm:%s188]
                %212 = vst [vmem:[%s196 + $0x38] sm:%s188] %v211
                %v213 = vld [vmem:[%s195 + $0xc0] sm:%s188]
                %214 = vst [vmem:[%s196 + $0x40] sm:%s188] %v213
                %v215 = vld [vmem:[%s195 + $0xd8] sm:%s188]
                %216 = vst [vmem:[%s196 + $0x48] sm:%s188] %v215
                %v217 = vld [vmem:[%s195 + $0xf0] sm:%s188]
                %218 = vst [vmem:[%s196 + $0x50] sm:%s188] %v217
                %v219 = vld [vmem:[%s195 + $0x108] sm:%s188]
                %220 = vst [vmem:[%s196 + $0x58] sm:%s188] %v219
                %v221 = vld [vmem:[%s195 + $0x120] sm:%s188]
                %222 = vst [vmem:[%s196 + $0x60] sm:%s188] %v221
                %v223 = vld [vmem:[%s195 + $0x138] sm:%s188]
                %224 = vst [vmem:[%s196 + $0x68] sm:%s188] %v223
                %v225 = vld [vmem:[%s195 + $0x150] sm:%s188]
                %226 = vst [vmem:[%s196 + $0x70] sm:%s188] %v225
                %v227 = vld [vmem:[%s195 + $0x168] sm:%s188]
                %228 = vst [vmem:[%s196 + $0x78] sm:%s188] %v227
              $region41: #{policy_network_forward.3} parent=35 // loop_footer
                %s194 = sadd.s32 1, %s190
              $region42: #{policy_network_forward.3} parent=35 // loop_footer_branch
                %189 = sbr.rel target = $region38
              $region43: #{policy_network_forward.3} parent=35 // loop_exit
                _
            $region36: #{policy_network_forward.3} parent=27 // pred_fallthru
              _
          $region28: #{policy_network_forward.3} parent=23 // pred_fallthru
            _
          %273 = vnop
        $region24: #{policy_network_forward.3} parent=19 // pred_fallthru
          _
        // Predicated region
        $region59: #{policy_network_forward.3} parent=19 // pred_check
          %p274 = pneg %p104
        $region60: #{policy_network_forward.3} parent=19 // pred_check_branch
          %276 = sbr.rel (%p274) target = $region62
        $region61: #{policy_network_forward.3} parent=19 // pred_region
          %p277 = scmp.lt.s32.totalorder %s17, 2
          %s278 = scalar_select %p277, %s17, 2
          %s279 = scalar_lea.vmem %s2, %s278
        $region62: #{policy_network_forward.3} parent=19 // pred_fallthru
          _
      $region20: #{policy_network_forward.3} parent=5 // pred_fallthru
        _
      %p280 = scmp.le.s32.totalorder 1, %s9
      %p281 = scmp.lt.s32.totalorder %s9, 4
      %p282 = pnand %p280, %p281
      %p283 = pneg %p282
      // Predicated region
      $region63: #{policy_network_forward.3} parent=5 // pred_check
        _
      $region64: #{policy_network_forward.3} parent=5 // pred_check_branch
        %285 = sbr.rel (%p282) target = $region66
      $region65: #{policy_network_forward.3} parent=5 // pred_region
        %s286 = ssub.s32 %s9, 1
        %s287 = sand.u32 %s71, 1
        %s288 = sand.u32 %s71, 1
        %s289 = smul.addr %s288, 128
        %s290 = scalar_lea.vmem [#allocation3], %s289
        // Predicated region
        $region67: #{policy_network_forward.3} parent=65 // pred_check
          %p291 = pneg %p84
        $region68: #{policy_network_forward.3} parent=65 // pred_check_branch
          %293 = sbr.rel (%p291) target = $region70
        $region69: #{policy_network_forward.3} parent=65 // pred_region
          _
        $region70: #{policy_network_forward.3} parent=65 // pred_fallthru
          _
        %s294 = smul.u32 8, %s19
        %p295 = scmp.lt.s32.totalorder %s294, 7
        %s296 = scalar_select %p295, %s294, 7
        %p297 = scmp.lt.s32.totalorder %s21, 0
        %s298 = scalar_select %p297, %s21, 0
        %s299 = sadd.s32 %s298, %s296
        %s300 = smul.addr %s299, 8
        %s301 = scalar_lea.vmem %s0, %s300
        %p302 = pneg %p56
        %p303 = pneg %p53
        %s304 = sand.u32 %s71, 1
        %s305 = sand.u32 %s71, 1
        %s306 = smul.addr %s305, 128
        %s307 = scalar_lea.vmem [#allocation3], %s306
        %p308 = pneg %p84
        %p309 = pneg %p81
        %p310 = scmp.lt.s32.totalorder %s20, 2
        %s311 = scalar_select %p310, %s20, 2
        %s312 = scalar_lea.vmem %s2, %s311
        %p313 = pneg %p110
        %p314 = pneg %p107
        %p315 = pneg %p138
        %p316 = pneg %p135
        %s317 = sand.u32 %s125, 1
        %s318 = sand.u32 %s125, 1
        %s319 = smul.addr %s318, 64
        %s320 = scalar_lea.vmem [#allocation4], %s319
        %s321 = smul.u32 8, %s19
        %p322 = scmp.lt.s32.totalorder %s321, 7
        %s323 = scalar_select %p322, %s321, 7
        %p324 = scmp.lt.s32.totalorder %s21, 0
        %s325 = scalar_select %p324, %s21, 0
        %s326 = sadd.s32 %s325, %s323
        %s327 = smul.addr %s326, 8
        %s328 = scalar_lea.vmem %s0, %s327
        %s329 = smul.u32 8, %s19
        %s330 = smul.u32 16, %s21
        %p331 = scmp.lt.s32.totalorder %s20, 2
        %s332 = scalar_select %p331, %s20, 2
        %s333 = scalar_lea.vmem %s2, %s332
        %s334 = smul.u32 8, %s19
        %p335 = scmp.eq.s32.totalorder %s21, 0
        // Predicated region
        $region71: #{policy_network_forward.3} parent=65 // pred_check
          %p336 = pneg %p335
        $region72: #{policy_network_forward.3} parent=65 // pred_check_branch
          %338 = sbr.rel (%p336) target = $region74
        $region73: #{policy_network_forward.3} parent=65 // pred_region
          %339 = vst [vmem:[#allocation2] sm:$0xff] 0.0
          %340 = vst [vmem:[#allocation2 + $0x8] sm:$0xff] 0.0
          %341 = vst [vmem:[#allocation2 + $0x10] sm:$0xff] 0.0
          %342 = vst [vmem:[#allocation2 + $0x18] sm:$0xff] 0.0
          %343 = vst [vmem:[#allocation2 + $0x20] sm:$0xff] 0.0
          %344 = vst [vmem:[#allocation2 + $0x28] sm:$0xff] 0.0
          %345 = vst [vmem:[#allocation2 + $0x30] sm:$0xff] 0.0
          %346 = vst [vmem:[#allocation2 + $0x38] sm:$0xff] 0.0
        $region74: #{policy_network_forward.3} parent=65 // pred_fallthru
          _
        %v347 = vld [vmem:[#allocation2] sm:$0xff]
        %v348 = vld [vmem:[#allocation2 + $0x8] sm:$0xff]
        %v349 = vld [vmem:[#allocation2 + $0x10] sm:$0xff]
        %v350 = vld [vmem:[#allocation2 + $0x18] sm:$0xff]
        %v351 = vld [vmem:[#allocation2 + $0x20] sm:$0xff]
        %v352 = vld [vmem:[#allocation2 + $0x28] sm:$0xff]
        %v353 = vld [vmem:[#allocation2 + $0x30] sm:$0xff]
        %v354 = vld [vmem:[#allocation2 + $0x38] sm:$0xff]
        %v355 = vld [vmem:[%s328] sm:$0xff]
        %v356 = vld [vmem:[%s328 + $0x8] sm:$0xff]
        %v357 = vld [vmem:[%s328 + $0x10] sm:$0xff]
        %v358 = vld [vmem:[%s328 + $0x18] sm:$0xff]
        %v359 = vld [vmem:[%s328 + $0x20] sm:$0xff]
        %v360 = vld [vmem:[%s328 + $0x28] sm:$0xff]
        %v361 = vld [vmem:[%s328 + $0x30] sm:$0xff]
        %v362 = vld [vmem:[%s328 + $0x38] sm:$0xff]
        %v363 = vld [vmem:[%s290] sm:$0xff]
        %v364 = vld [vmem:[%s290 + $0x8] sm:$0xff]
        %v365 = vld [vmem:[%s290 + $0x10] sm:$0xff]
        %v366 = vld [vmem:[%s290 + $0x18] sm:$0xff]
        %v367 = vld [vmem:[%s290 + $0x20] sm:$0xff]
        %v368 = vld [vmem:[%s290 + $0x28] sm:$0xff]
        %v369 = vld [vmem:[%s290 + $0x30] sm:$0xff]
        %v370 = vld [vmem:[%s290 + $0x38] sm:$0xff]
        %v371 = vld [vmem:[%s290 + $0x40] sm:$0xff]
        %v372 = vld [vmem:[%s290 + $0x48] sm:$0xff]
        %v373 = vld [vmem:[%s290 + $0x50] sm:$0xff]
        %v374 = vld [vmem:[%s290 + $0x58] sm:$0xff]
        %v375 = vld [vmem:[%s290 + $0x60] sm:$0xff]
        %v376 = vld [vmem:[%s290 + $0x68] sm:$0xff]
        %v377 = vld [vmem:[%s290 + $0x70] sm:$0xff]
        %v378 = vld [vmem:[%s290 + $0x78] sm:$0xff]
        %379 = vmatpush.msra.mxu0 %v378
        %380 = vmatpush.msra.mxu0 %v377
        %381 = vmatpush.msra.mxu0 %v376
        %382 = vmatpush.msra.mxu0 %v375
        %383 = vmatpush.msra.mxu0 %v374
        %384 = vmatpush.msra.mxu0 %v373
        %385 = vmatpush.msra.mxu0 %v372
        %386 = vmatpush.msra.mxu0 %v371
        %387 = vmatpush.msra.mxu0 %v370
        %388 = vmatpush.msra.mxu0 %v369
        %389 = vmatpush.msra.mxu0 %v368
        %390 = vmatpush.msra.mxu0 %v367
        %391 = vmatpush.msra.mxu0 %v366
        %392 = vmatpush.msra.mxu0 %v365
        %393 = vmatpush.msra.mxu0 %v364
        %394 = vmatpush.msra.mxu0 %v363
        %395 = vmatmul.f32.gmra.mxu0 %v355
        %v396 = vpop.f32.mrf.mxu0
        %v397 = vadd.f32 0.0, %v396
        %398 = vmatmul.f32.gmra.mxu0 %v356
        %v399 = vpop.f32.mrf.mxu0
        %v400 = vadd.f32 0.0, %v399
        %401 = vmatmul.f32.gmra.mxu0 %v357
        %v402 = vpop.f32.mrf.mxu0
        %v403 = vadd.f32 0.0, %v402
        %404 = vmatmul.f32.gmra.mxu0 %v358
        %v405 = vpop.f32.mrf.mxu0
        %v406 = vadd.f32 0.0, %v405
        %407 = vmatmul.f32.gmra.mxu0 %v359
        %v408 = vpop.f32.mrf.mxu0
        %v409 = vadd.f32 0.0, %v408
        %410 = vmatmul.f32.gmra.mxu0 %v360
        %v411 = vpop.f32.mrf.mxu0
        %v412 = vadd.f32 0.0, %v411
        %413 = vmatmul.f32.gmra.mxu0 %v361
        %v414 = vpop.f32.mrf.mxu0
        %v415 = vadd.f32 0.0, %v414
        %416 = vmatmul.f32.gmra.mxu0 %v362
        %v417 = vpop.f32.mrf.mxu0
        %v418 = vadd.f32 0.0, %v417
        %419 = vdwg.mxu0
        %v420 = vadd.f32 %v347, %v397
        %v421 = vadd.f32 %v348, %v400
        %v422 = vadd.f32 %v349, %v403
        %v423 = vadd.f32 %v350, %v406
        %v424 = vadd.f32 %v351, %v409
        %v425 = vadd.f32 %v352, %v412
        %v426 = vadd.f32 %v353, %v415
        %v427 = vadd.f32 %v354, %v418
        %428 = vst [vmem:[#allocation2] sm:$0xff] %v420
        %429 = vst [vmem:[#allocation2 + $0x8] sm:$0xff] %v421
        %430 = vst [vmem:[#allocation2 + $0x10] sm:$0xff] %v422
        %431 = vst [vmem:[#allocation2 + $0x18] sm:$0xff] %v423
        %432 = vst [vmem:[#allocation2 + $0x20] sm:$0xff] %v424
        %433 = vst [vmem:[#allocation2 + $0x28] sm:$0xff] %v425
        %434 = vst [vmem:[#allocation2 + $0x30] sm:$0xff] %v426
        %435 = vst [vmem:[#allocation2 + $0x38] sm:$0xff] %v427
        // Predicated region
        $region75: #{policy_network_forward.3} parent=65 // pred_check
          %p436 = pneg %p335
        $region76: #{policy_network_forward.3} parent=65 // pred_check_branch
          %438 = sbr.rel (%p436) target = $region78
        $region77: #{policy_network_forward.3} parent=65 // pred_region
          %v439 = vld [vmem:[#allocation2] sm:$0xff]
          %v440 = vld [vmem:[#allocation2 + $0x8] sm:$0xff]
          %v441 = vld [vmem:[#allocation2 + $0x10] sm:$0xff]
          %v442 = vld [vmem:[#allocation2 + $0x18] sm:$0xff]
          %v443 = vld [vmem:[#allocation2 + $0x20] sm:$0xff]
          %v444 = vld [vmem:[#allocation2 + $0x28] sm:$0xff]
          %v445 = vld [vmem:[#allocation2 + $0x30] sm:$0xff]
          %v446 = vld [vmem:[#allocation2 + $0x38] sm:$0xff]
          %v447 = vld [vmem:[%s333] sm:$0x1]
          %v449 = vperm.slane %v447, 0
          %v451 = vadd.f32 %v439, %v449
          %v452 = vadd.f32 %v440, %v449
          %v453 = vadd.f32 %v441, %v449
          %v454 = vadd.f32 %v442, %v449
          %v455 = vadd.f32 %v443, %v449
          %v456 = vadd.f32 %v444, %v449
          %v457 = vadd.f32 %v445, %v449
          %v458 = vadd.f32 %v446, %v449
          %459 = vst [vmem:[%s320] sm:$0xff] %v451
          %460 = vst [vmem:[%s320 + $0x8] sm:$0xff] %v452
          %461 = vst [vmem:[%s320 + $0x10] sm:$0xff] %v453
          %462 = vst [vmem:[%s320 + $0x18] sm:$0xff] %v454
          %463 = vst [vmem:[%s320 + $0x20] sm:$0xff] %v455
          %464 = vst [vmem:[%s320 + $0x28] sm:$0xff] %v456
          %465 = vst [vmem:[%s320 + $0x30] sm:$0xff] %v457
          %466 = vst [vmem:[%s320 + $0x38] sm:$0xff] %v458
        $region78: #{policy_network_forward.3} parent=65 // pred_fallthru
          _
        %s467 = sand.u32 %s125, 1
        %s468 = sand.u32 %s125, 1
        %s469 = smul.addr %s468, 64
        %s470 = scalar_lea.vmem [#allocation4], %s469
        // Predicated region
        $region79: #{policy_network_forward.3} parent=65 // pred_check
          %p471 = pneg %p135
        $region80: #{policy_network_forward.3} parent=65 // pred_check_branch
          %473 = sbr.rel (%p471) target = $region82
        $region81: #{policy_network_forward.3} parent=65 // pred_region
          %s474 = smul.u32 8, %s19
          %s475 = smul.addr %s474, 3
          %s476 = sadd.s32 %s20, %s475
          %s477 = smul.addr %s476, 8
          %s478 = scalar_lea.vmem %s3, %s477
          // Predicated region
          $region83: #{policy_network_forward.3} parent=81 // pred_check
            _
          $region84: #{policy_network_forward.3} parent=81 // pred_check_branch
            %480 = sbr.rel (0) target = $region86
          $region85: #{policy_network_forward.3} parent=81 // pred_region
            // Predicated region
            $region87: #{policy_network_forward.3} parent=85 // pred_check
              _
            $region88: #{policy_network_forward.3} parent=85 // pred_check_branch
              %482 = sbr.rel (0) target = $region90
            $region89: #{policy_network_forward.3} parent=85 // pred_region
              // Predicated region
              $region102: #{policy_network_forward.3} parent=89 // pred_check
                _
              $region103: #{policy_network_forward.3} parent=89 // pred_check_branch
                %512 = sbr.rel (0) target = $region105
              $region104: #{policy_network_forward.3} parent=89 // pred_region
                loop: start=0, step=1, limit=1
                $region106: #{policy_network_forward.3} parent=104 // loop_pre_header
                  _
                $region107: #{policy_network_forward.3} parent=104 // loop_header
                  %s514 = sphi 0, %s518
                  %p515 = scmp.ge.s32.totalorder %s514, 1
                  %s519 = sphi %s470, %s470
                  %s520 = sphi %s478, %s478
                $region108: #{policy_network_forward.3} parent=104 // loop_header_branch
                  %517 = sbr.rel (%p515) target = $region112
                $region109: #{policy_network_forward.3} parent=104 // loop_body
                  %v521 = vld [vmem:[%s519] sm:$0xff]
                  %522 = vst [vmem:[%s520] sm:$0xff] %v521
                  %v523 = vld [vmem:[%s519 + $0x8] sm:$0xff]
                  %524 = vst [vmem:[%s520 + $0x18] sm:$0xff] %v523
                  %v525 = vld [vmem:[%s519 + $0x10] sm:$0xff]
                  %526 = vst [vmem:[%s520 + $0x30] sm:$0xff] %v525
                  %v527 = vld [vmem:[%s519 + $0x18] sm:$0xff]
                  %528 = vst [vmem:[%s520 + $0x48] sm:$0xff] %v527
                  %v529 = vld [vmem:[%s519 + $0x20] sm:$0xff]
                  %530 = vst [vmem:[%s520 + $0x60] sm:$0xff] %v529
                  %v531 = vld [vmem:[%s519 + $0x28] sm:$0xff]
                  %532 = vst [vmem:[%s520 + $0x78] sm:$0xff] %v531
                  %v533 = vld [vmem:[%s519 + $0x30] sm:$0xff]
                  %534 = vst [vmem:[%s520 + $0x90] sm:$0xff] %v533
                  %v535 = vld [vmem:[%s519 + $0x38] sm:$0xff]
                  %536 = vst [vmem:[%s520 + $0xa8] sm:$0xff] %v535
                $region110: #{policy_network_forward.3} parent=104 // loop_footer
                  %s518 = sadd.s32 1, %s514
                $region111: #{policy_network_forward.3} parent=104 // loop_footer_branch
                  %513 = sbr.rel target = $region107
                $region112: #{policy_network_forward.3} parent=104 // loop_exit
                  _
              $region105: #{policy_network_forward.3} parent=89 // pred_fallthru
                _
              // Predicated region
              $region113: #{policy_network_forward.3} parent=89 // pred_check
                _
              $region114: #{policy_network_forward.3} parent=89 // pred_check_branch
                %538 = sbr.rel target = $region116
              $region115: #{policy_network_forward.3} parent=89 // pred_region
                _
              $region116: #{policy_network_forward.3} parent=89 // pred_fallthru
                _
            $region90: #{policy_network_forward.3} parent=85 // pred_fallthru
              _
            // Predicated region
            $region91: #{policy_network_forward.3} parent=85 // pred_check
              _
            $region92: #{policy_network_forward.3} parent=85 // pred_check_branch
              %484 = sbr.rel target = $region94
            $region93: #{policy_network_forward.3} parent=85 // pred_region
              %s486 = ssub.s32 256, 1
              loop: start=0, step=1, limit=1
              $region95: #{policy_network_forward.3} parent=93 // loop_pre_header
                _
              $region96: #{policy_network_forward.3} parent=93 // loop_header
                %s488 = sphi 0, %s492
                %p489 = scmp.ge.s32.totalorder %s488, 1
                %s493 = sphi %s470, %s470
                %s494 = sphi %s478, %s478
              $region97: #{policy_network_forward.3} parent=93 // loop_header_branch
                %491 = sbr.rel (%p489) target = $region101
              $region98: #{policy_network_forward.3} parent=93 // loop_body
                %v495 = vld [vmem:[%s493] sm:%s486]
                %496 = vst [vmem:[%s494] sm:%s486] %v495
                %v497 = vld [vmem:[%s493 + $0x8] sm:%s486]
                %498 = vst [vmem:[%s494 + $0x18] sm:%s486] %v497
                %v499 = vld [vmem:[%s493 + $0x10] sm:%s486]
                %500 = vst [vmem:[%s494 + $0x30] sm:%s486] %v499
                %v501 = vld [vmem:[%s493 + $0x18] sm:%s486]
                %502 = vst [vmem:[%s494 + $0x48] sm:%s486] %v501
                %v503 = vld [vmem:[%s493 + $0x20] sm:%s486]
                %504 = vst [vmem:[%s494 + $0x60] sm:%s486] %v503
                %v505 = vld [vmem:[%s493 + $0x28] sm:%s486]
                %506 = vst [vmem:[%s494 + $0x78] sm:%s486] %v505
                %v507 = vld [vmem:[%s493 + $0x30] sm:%s486]
                %508 = vst [vmem:[%s494 + $0x90] sm:%s486] %v507
                %v509 = vld [vmem:[%s493 + $0x38] sm:%s486]
                %510 = vst [vmem:[%s494 + $0xa8] sm:%s486] %v509
              $region99: #{policy_network_forward.3} parent=93 // loop_footer
                %s492 = sadd.s32 1, %s488
              $region100: #{policy_network_forward.3} parent=93 // loop_footer_branch
                %487 = sbr.rel target = $region96
              $region101: #{policy_network_forward.3} parent=93 // loop_exit
                _
            $region94: #{policy_network_forward.3} parent=85 // pred_fallthru
              _
          $region86: #{policy_network_forward.3} parent=81 // pred_fallthru
            _
          %539 = vnop
        $region82: #{policy_network_forward.3} parent=65 // pred_fallthru
          _
      $region66: #{policy_network_forward.3} parent=5 // pred_fallthru
        _
      %p540 = scmp.le.s32.totalorder 2, %s9
      // Predicated region
      $region117: #{policy_network_forward.3} parent=5 // pred_check
        %p541 = pneg %p540
      $region118: #{policy_network_forward.3} parent=5 // pred_check_branch
        %543 = sbr.rel (%p541) target = $region120
      $region119: #{policy_network_forward.3} parent=5 // pred_region
        %s544 = ssub.s32 %s9, 2
        // Predicated region
        $region121: #{policy_network_forward.3} parent=119 // pred_check
          %p545 = pneg %p141
        $region122: #{policy_network_forward.3} parent=119 // pred_check_branch
          %547 = sbr.rel (%p545) target = $region124
        $region123: #{policy_network_forward.3} parent=119 // pred_region
          %s548 = sand.u32 %s126, 1
          %s549 = sand.u32 %s126, 1
          %s550 = smul.addr %s549, 64
          %s551 = scalar_lea.vmem [#allocation4], %s550
        $region124: #{policy_network_forward.3} parent=119 // pred_fallthru
          _
      $region120: #{policy_network_forward.3} parent=5 // pred_fallthru
        _
    $region6: #{policy_network_forward.3} parent=1 // loop_footer
      %s13 = sadd.s32 1, %s9
    $region7: #{policy_network_forward.3} parent=1 // loop_footer_branch
      %8 = sbr.rel target = $region3
    $region8: #{policy_network_forward.3} parent=1 // loop_exit
      _

// kernel: policy_network_forward.5
$region0: #{policy_network_forward.5}
  #allocation0 [shape = 'u32[]', space=smem, size = 0x4, offset = 0x4, fixed_abs, tag = 'smem constant byte address 0x4 - core index']
  #allocation1 [shape = 'u32[72,128]{1,0:T(1,128)}', space=vmem, size = 0x9000, scoped, tag = 'internal scratch']
  #allocation2 [shape = 'f32[64,128]{1,0:T(8,128)}', space=vmem, size = 0x8000, scoped, tag = 'scratch operand']
  %s0 = inlined_call_operand.vmem [shape: f32[64,128], index: 0, kind: input, shape index: {}]
  %s1 = inlined_call_operand.vmem [shape: f32[128,128], index: 1, kind: input, shape index: {}]
  %s2 = inlined_call_operand.vmem [shape: f32[1,128], index: 2, kind: input, shape index: {}]
  %s3 = inlined_call_operand.vmem [shape: f32[64,128], index: 3, kind: output, shape index: {}]
  %s4 = sld [smem:[#allocation0]]
  $region30: #{policy_network_forward.5} parent=0
    _
  %s6 = ssub.s32 1, %s4
  %s7 = scalar_select 0, %s6, %s4
  // Predicated region
  $region2: #{policy_network_forward.5} parent=0 // pred_check
    _
  $region3: #{policy_network_forward.5} parent=0 // pred_check_branch
    %9 = sbr.rel (0) target = $region5
  $region4: #{policy_network_forward.5} parent=0 // pred_region
    _
  $region5: #{policy_network_forward.5} parent=0 // pred_fallthru
    _
  // Predicated region
  $region6: #{policy_network_forward.5} parent=0 // pred_check
    _
  $region7: #{policy_network_forward.5} parent=0 // pred_check_branch
    %11 = sbr.rel (0) target = $region9
  $region8: #{policy_network_forward.5} parent=0 // pred_region
    _
  $region9: #{policy_network_forward.5} parent=0 // pred_fallthru
    _
  // Predicated region
  $region10: #{policy_network_forward.5} parent=0 // pred_check
    _
  $region11: #{policy_network_forward.5} parent=0 // pred_check_branch
    %13 = sbr.rel (0) target = $region13
  $region12: #{policy_network_forward.5} parent=0 // pred_region
    _
  $region13: #{policy_network_forward.5} parent=0 // pred_fallthru
    _
  %p14 = scmp.eq.s32.totalorder 0, 0
  // Predicated region
  $region14: #{policy_network_forward.5} parent=0 // pred_check
    %p15 = pneg %p14
  $region15: #{policy_network_forward.5} parent=0 // pred_check_branch
    %17 = sbr.rel (%p15) target = $region17
  $region16: #{policy_network_forward.5} parent=0 // pred_region
    %18 = vst [vmem:[#allocation2] sm:$0xff] 0.0
    %19 = vst [vmem:[#allocation2 + $0x8] sm:$0xff] 0.0
    %20 = vst [vmem:[#allocation2 + $0x10] sm:$0xff] 0.0
    %21 = vst [vmem:[#allocation2 + $0x18] sm:$0xff] 0.0
    %22 = vst [vmem:[#allocation2 + $0x20] sm:$0xff] 0.0
    %23 = vst [vmem:[#allocation2 + $0x28] sm:$0xff] 0.0
    %24 = vst [vmem:[#allocation2 + $0x30] sm:$0xff] 0.0
    %25 = vst [vmem:[#allocation2 + $0x38] sm:$0xff] 0.0
  $region17: #{policy_network_forward.5} parent=0 // pred_fallthru
    _
  %v26 = vld [vmem:[#allocation2] sm:$0xff]
  %v27 = vld [vmem:[#allocation2 + $0x8] sm:$0xff]
  %v28 = vld [vmem:[#allocation2 + $0x10] sm:$0xff]
  %v29 = vld [vmem:[#allocation2 + $0x18] sm:$0xff]
  %v30 = vld [vmem:[#allocation2 + $0x20] sm:$0xff]
  %v31 = vld [vmem:[#allocation2 + $0x28] sm:$0xff]
  %v32 = vld [vmem:[#allocation2 + $0x30] sm:$0xff]
  %v33 = vld [vmem:[#allocation2 + $0x38] sm:$0xff]
  %v34 = vld [vmem:[%s0] sm:$0xff]
  %v35 = vld [vmem:[%s0 + $0x8] sm:$0xff]
  %v36 = vld [vmem:[%s0 + $0x10] sm:$0xff]
  %v37 = vld [vmem:[%s0 + $0x18] sm:$0xff]
  %v38 = vld [vmem:[%s0 + $0x20] sm:$0xff]
  %v39 = vld [vmem:[%s0 + $0x28] sm:$0xff]
  %v40 = vld [vmem:[%s0 + $0x30] sm:$0xff]
  %v41 = vld [vmem:[%s0 + $0x38] sm:$0xff]
  %v42 = vld [vmem:[%s1] sm:$0xff]
  %v43 = vld [vmem:[%s1 + $0x8] sm:$0xff]
  %v44 = vld [vmem:[%s1 + $0x10] sm:$0xff]
  %v45 = vld [vmem:[%s1 + $0x18] sm:$0xff]
  %v46 = vld [vmem:[%s1 + $0x20] sm:$0xff]
  %v47 = vld [vmem:[%s1 + $0x28] sm:$0xff]
  %v48 = vld [vmem:[%s1 + $0x30] sm:$0xff]
  %v49 = vld [vmem:[%s1 + $0x38] sm:$0xff]
  %v50 = vld [vmem:[%s1 + $0x40] sm:$0xff]
  %v51 = vld [vmem:[%s1 + $0x48] sm:$0xff]
  %v52 = vld [vmem:[%s1 + $0x50] sm:$0xff]
  %v53 = vld [vmem:[%s1 + $0x58] sm:$0xff]
  %v54 = vld [vmem:[%s1 + $0x60] sm:$0xff]
  %v55 = vld [vmem:[%s1 + $0x68] sm:$0xff]
  %v56 = vld [vmem:[%s1 + $0x70] sm:$0xff]
  %v57 = vld [vmem:[%s1 + $0x78] sm:$0xff]
  %58 = vmatpush.msra.mxu0 %v57
  %59 = vmatpush.msra.mxu0 %v56
  %60 = vmatpush.msra.mxu0 %v55
  %61 = vmatpush.msra.mxu0 %v54
  %62 = vmatpush.msra.mxu0 %v53
  %63 = vmatpush.msra.mxu0 %v52
  %64 = vmatpush.msra.mxu0 %v51
  %65 = vmatpush.msra.mxu0 %v50
  %66 = vmatpush.msra.mxu0 %v49
  %67 = vmatpush.msra.mxu0 %v48
  %68 = vmatpush.msra.mxu0 %v47
  %69 = vmatpush.msra.mxu0 %v46
  %70 = vmatpush.msra.mxu0 %v45
  %71 = vmatpush.msra.mxu0 %v44
  %72 = vmatpush.msra.mxu0 %v43
  %73 = vmatpush.msra.mxu0 %v42
  %74 = vmatmul.f32.gmra.mxu0 %v34
  %v75 = vpop.f32.mrf.mxu0
  %v76 = vadd.f32 0.0, %v75
  %77 = vmatmul.f32.gmra.mxu0 %v35
  %v78 = vpop.f32.mrf.mxu0
  %v79 = vadd.f32 0.0, %v78
  %80 = vmatmul.f32.gmra.mxu0 %v36
  %v81 = vpop.f32.mrf.mxu0
  %v82 = vadd.f32 0.0, %v81
  %83 = vmatmul.f32.gmra.mxu0 %v37
  %v84 = vpop.f32.mrf.mxu0
  %v85 = vadd.f32 0.0, %v84
  %86 = vmatmul.f32.gmra.mxu0 %v38
  %v87 = vpop.f32.mrf.mxu0
  %v88 = vadd.f32 0.0, %v87
  %89 = vmatmul.f32.gmra.mxu0 %v39
  %v90 = vpop.f32.mrf.mxu0
  %v91 = vadd.f32 0.0, %v90
  %92 = vmatmul.f32.gmra.mxu0 %v40
  %v93 = vpop.f32.mrf.mxu0
  %v94 = vadd.f32 0.0, %v93
  %95 = vmatmul.f32.gmra.mxu0 %v41
  %v96 = vpop.f32.mrf.mxu0
  %v97 = vadd.f32 0.0, %v96
  %98 = vdwg.mxu0
  %v99 = vadd.f32 %v26, %v76
  %v100 = vadd.f32 %v27, %v79
  %v101 = vadd.f32 %v28, %v82
  %v102 = vadd.f32 %v29, %v85
  %v103 = vadd.f32 %v30, %v88
  %v104 = vadd.f32 %v31, %v91
  %v105 = vadd.f32 %v32, %v94
  %v106 = vadd.f32 %v33, %v97
  %107 = vst [vmem:[#allocation2] sm:$0xff] %v99
  %108 = vst [vmem:[#allocation2 + $0x8] sm:$0xff] %v100
  %109 = vst [vmem:[#allocation2 + $0x10] sm:$0xff] %v101
  %110 = vst [vmem:[#allocation2 + $0x18] sm:$0xff] %v102
  %111 = vst [vmem:[#allocation2 + $0x20] sm:$0xff] %v103
  %112 = vst [vmem:[#allocation2 + $0x28] sm:$0xff] %v104
  %113 = vst [vmem:[#allocation2 + $0x30] sm:$0xff] %v105
  %114 = vst [vmem:[#allocation2 + $0x38] sm:$0xff] %v106
  // Predicated region
  $region18: #{policy_network_forward.5} parent=0 // pred_check
    %p115 = pneg %p14
  $region19: #{policy_network_forward.5} parent=0 // pred_check_branch
    %117 = sbr.rel (%p115) target = $region21
  $region20: #{policy_network_forward.5} parent=0 // pred_region
    %v118 = vld [vmem:[#allocation2] sm:$0xff]
    %v119 = vld [vmem:[#allocation2 + $0x8] sm:$0xff]
    %v120 = vld [vmem:[#allocation2 + $0x10] sm:$0xff]
    %v121 = vld [vmem:[#allocation2 + $0x18] sm:$0xff]
    %v122 = vld [vmem:[#allocation2 + $0x20] sm:$0xff]
    %v123 = vld [vmem:[#allocation2 + $0x28] sm:$0xff]
    %v124 = vld [vmem:[#allocation2 + $0x30] sm:$0xff]
    %v125 = vld [vmem:[#allocation2 + $0x38] sm:$0xff]
    %v126 = vld [vmem:[%s2] sm:$0x1]
    %v128 = vperm.slane %v126, 0
    %v130 = vadd.f32 %v118, %v128
    %v131 = vadd.f32 %v119, %v128
    %v132 = vadd.f32 %v120, %v128
    %v133 = vadd.f32 %v121, %v128
    %v134 = vadd.f32 %v122, %v128
    %v135 = vadd.f32 %v123, %v128
    %v136 = vadd.f32 %v124, %v128
    %v137 = vadd.f32 %v125, %v128
    %138 = vst [vmem:[%s3] sm:$0xff] %v130
    %139 = vst [vmem:[%s3 + $0x8] sm:$0xff] %v131
    %140 = vst [vmem:[%s3 + $0x10] sm:$0xff] %v132
    %141 = vst [vmem:[%s3 + $0x18] sm:$0xff] %v133
    %142 = vst [vmem:[%s3 + $0x20] sm:$0xff] %v134
    %143 = vst [vmem:[%s3 + $0x28] sm:$0xff] %v135
    %144 = vst [vmem:[%s3 + $0x30] sm:$0xff] %v136
    %145 = vst [vmem:[%s3 + $0x38] sm:$0xff] %v137
  $region21: #{policy_network_forward.5} parent=0 // pred_fallthru
    _
  // Predicated region
  $region22: #{policy_network_forward.5} parent=0 // pred_check
    _
  $region23: #{policy_network_forward.5} parent=0 // pred_check_branch
    %147 = sbr.rel (0) target = $region25
  $region24: #{policy_network_forward.5} parent=0 // pred_region
    _
  $region25: #{policy_network_forward.5} parent=0 // pred_fallthru
    _
  // Predicated region
  $region26: #{policy_network_forward.5} parent=0 // pred_check
    _
  $region27: #{policy_network_forward.5} parent=0 // pred_check_branch
    %149 = sbr.rel (0) target = $region29
  $region28: #{policy_network_forward.5} parent=0 // pred_region
    _
  $region29: #{policy_network_forward.5} parent=0 // pred_fallthru
    _

// kernel: policy_network_forward.4
$region0: #{policy_network_forward.4}
  #allocation0 [shape = 'u32[]', space=smem, size = 0x4, offset = 0x4, fixed_abs, tag = 'smem constant byte address 0x4 - core index']
  #allocation1 [shape = 'u32[72,128]{1,0:T(1,128)}', space=vmem, size = 0x9000, scoped, tag = 'internal scratch']
  #allocation2 [shape = 'f32[8,128]{1,0:T(8,128)}', space=vmem, size = 0x1000, scoped, tag = 'scratch operand']
  %s0 = inlined_call_operand.vmem [shape: f32[8,8,384], index: 0, kind: input, shape index: {}]
  %s1 = inlined_call_operand.vmem [shape: f32[8,128], index: 1, kind: input, shape index: {}]
  %s2 = inlined_call_operand.vmem [shape: f32[128,384], index: 2, kind: input, shape index: {}]
  %s3 = inlined_call_operand.vmem [shape: f32[1,128], index: 3, kind: input, shape index: {}]
  %s4 = inlined_call_operand.vmem [shape: f32[8,8,128], index: 4, kind: output, shape index: {}]
  %s5 = sld [smem:[#allocation0]]
  $region30: #{policy_network_forward.4} parent=0
    _
  %s7 = ssub.s32 1, %s5
  %s8 = scalar_select 0, %s7, %s5
  // Predicated region
  $region2: #{policy_network_forward.4} parent=0 // pred_check
    _
  $region3: #{policy_network_forward.4} parent=0 // pred_check_branch
    %10 = sbr.rel (0) target = $region5
  $region4: #{policy_network_forward.4} parent=0 // pred_region
    _
  $region5: #{policy_network_forward.4} parent=0 // pred_fallthru
    _
  // Predicated region
  $region6: #{policy_network_forward.4} parent=0 // pred_check
    _
  $region7: #{policy_network_forward.4} parent=0 // pred_check_branch
    %12 = sbr.rel (0) target = $region9
  $region8: #{policy_network_forward.4} parent=0 // pred_region
    _
  $region9: #{policy_network_forward.4} parent=0 // pred_fallthru
    _
  // Predicated region
  $region10: #{policy_network_forward.4} parent=0 // pred_check
    _
  $region11: #{policy_network_forward.4} parent=0 // pred_check_branch
    %14 = sbr.rel (0) target = $region13
  $region12: #{policy_network_forward.4} parent=0 // pred_region
    _
  $region13: #{policy_network_forward.4} parent=0 // pred_fallthru
    _
  // Predicated region
  $region14: #{policy_network_forward.4} parent=0 // pred_check
    _
  $region15: #{policy_network_forward.4} parent=0 // pred_check_branch
    %16 = sbr.rel (0) target = $region17
  $region16: #{policy_network_forward.4} parent=0 // pred_region
    _
  $region17: #{policy_network_forward.4} parent=0 // pred_fallthru
    _
  %p17 = scmp.eq.s32.totalorder 0, 0
  // Predicated region
  $region18: #{policy_network_forward.4} parent=0 // pred_check
    %p18 = pneg %p17
  $region19: #{policy_network_forward.4} parent=0 // pred_check_branch
    %20 = sbr.rel (%p18) target = $region21
  $region20: #{policy_network_forward.4} parent=0 // pred_region
    %v21 = vld [vmem:[%s1] sm:$0xff]
    %22 = vst [vmem:[#allocation2] sm:$0xff] %v21
  $region21: #{policy_network_forward.4} parent=0 // pred_fallthru
    _
  %v23 = vld [vmem:[%s2] sm:$0xff]
  %v24 = vld [vmem:[%s2 + $0x8] sm:$0xff]
  %v25 = vld [vmem:[%s2 + $0x10] sm:$0xff]
  %v26 = vld [vmem:[%s2 + $0x18] sm:$0xff]
  %v27 = vld [vmem:[%s2 + $0x20] sm:$0xff]
  %v28 = vld [vmem:[%s2 + $0x28] sm:$0xff]
  %v29 = vld [vmem:[%s2 + $0x30] sm:$0xff]
  %v30 = vld [vmem:[%s2 + $0x38] sm:$0xff]
  %v31 = vld [vmem:[%s2 + $0x40] sm:$0xff]
  %v32 = vld [vmem:[%s2 + $0x48] sm:$0xff]
  %v33 = vld [vmem:[%s2 + $0x50] sm:$0xff]
  %v34 = vld [vmem:[%s2 + $0x58] sm:$0xff]
  %v35 = vld [vmem:[%s2 + $0x60] sm:$0xff]
  %v36 = vld [vmem:[%s2 + $0x68] sm:$0xff]
  %v37 = vld [vmem:[%s2 + $0x70] sm:$0xff]
  %v38 = vld [vmem:[%s2 + $0x78] sm:$0xff]
  %v39 = vld [vmem:[%s2 + $0x80] sm:$0xff]
  %v40 = vld [vmem:[%s2 + $0x88] sm:$0xff]
  %v41 = vld [vmem:[%s2 + $0x90] sm:$0xff]
  %v42 = vld [vmem:[%s2 + $0x98] sm:$0xff]
  %v43 = vld [vmem:[%s2 + $0xa0] sm:$0xff]
  %v44 = vld [vmem:[%s2 + $0xa8] sm:$0xff]
  %v45 = vld [vmem:[%s2 + $0xb0] sm:$0xff]
  %v46 = vld [vmem:[%s2 + $0xb8] sm:$0xff]
  %v47 = vld [vmem:[%s2 + $0xc0] sm:$0xff]
  %v48 = vld [vmem:[%s2 + $0xc8] sm:$0xff]
  %v49 = vld [vmem:[%s2 + $0xd0] sm:$0xff]
  %v50 = vld [vmem:[%s2 + $0xd8] sm:$0xff]
  %v51 = vld [vmem:[%s2 + $0xe0] sm:$0xff]
  %v52 = vld [vmem:[%s2 + $0xe8] sm:$0xff]
  %v53 = vld [vmem:[%s2 + $0xf0] sm:$0xff]
  %v54 = vld [vmem:[%s2 + $0xf8] sm:$0xff]
  %v55 = vld [vmem:[%s2 + $0x100] sm:$0xff]
  %v56 = vld [vmem:[%s2 + $0x108] sm:$0xff]
  %v57 = vld [vmem:[%s2 + $0x110] sm:$0xff]
  %v58 = vld [vmem:[%s2 + $0x118] sm:$0xff]
  %v59 = vld [vmem:[%s2 + $0x120] sm:$0xff]
  %v60 = vld [vmem:[%s2 + $0x128] sm:$0xff]
  %v61 = vld [vmem:[%s2 + $0x130] sm:$0xff]
  %v62 = vld [vmem:[%s2 + $0x138] sm:$0xff]
  %v63 = vld [vmem:[%s2 + $0x140] sm:$0xff]
  %v64 = vld [vmem:[%s2 + $0x148] sm:$0xff]
  %v65 = vld [vmem:[%s2 + $0x150] sm:$0xff]
  %v66 = vld [vmem:[%s2 + $0x158] sm:$0xff]
  %v67 = vld [vmem:[%s2 + $0x160] sm:$0xff]
  %v68 = vld [vmem:[%s2 + $0x168] sm:$0xff]
  %v69 = vld [vmem:[%s2 + $0x170] sm:$0xff]
  %v70 = vld [vmem:[%s2 + $0x178] sm:$0xff]
  %v71 = vld [vmem:[%s3] sm:$0x1]
  %v73 = vperm.slane %v71, 0
  %v75 = vld [vmem:[#allocation2] sm:$0xff]
  %76 = vmatpush.msra.mxu0 %v68
  %77 = vmatpush.msra.mxu0 %v65
  %78 = vmatpush.msra.mxu0 %v62
  %79 = vmatpush.msra.mxu0 %v59
  %80 = vmatpush.msra.mxu0 %v56
  %81 = vmatpush.msra.mxu0 %v53
  %82 = vmatpush.msra.mxu0 %v50
  %83 = vmatpush.msra.mxu0 %v47
  %84 = vmatpush.msra.mxu0 %v44
  %85 = vmatpush.msra.mxu0 %v41
  %86 = vmatpush.msra.mxu0 %v38
  %87 = vmatpush.msra.mxu0 %v35
  %88 = vmatpush.msra.mxu0 %v32
  %89 = vmatpush.msra.mxu0 %v29
  %90 = vmatpush.msra.mxu0 %v26
  %91 = vmatpush.msra.mxu0 %v23
  %92 = vmatmul.f32.gmra.mxu0 %v75
  %v93 = vpop.f32.mrf.mxu0
  %v94 = vadd.f32 0.0, %v93
  %95 = vdwg.mxu0
  %96 = vmatpush.msra.mxu0 %v69
  %97 = vmatpush.msra.mxu0 %v66
  %98 = vmatpush.msra.mxu0 %v63
  %99 = vmatpush.msra.mxu0 %v60
  %100 = vmatpush.msra.mxu0 %v57
  %101 = vmatpush.msra.mxu0 %v54
  %102 = vmatpush.msra.mxu0 %v51
  %103 = vmatpush.msra.mxu0 %v48
  %104 = vmatpush.msra.mxu0 %v45
  %105 = vmatpush.msra.mxu0 %v42
  %106 = vmatpush.msra.mxu0 %v39
  %107 = vmatpush.msra.mxu0 %v36
  %108 = vmatpush.msra.mxu0 %v33
  %109 = vmatpush.msra.mxu0 %v30
  %110 = vmatpush.msra.mxu0 %v27
  %111 = vmatpush.msra.mxu0 %v24
  %112 = vmatmul.f32.gmra.mxu0 %v75
  %v113 = vpop.f32.mrf.mxu0
  %v114 = vadd.f32 0.0, %v113
  %115 = vdwg.mxu0
  %116 = vmatpush.msra.mxu0 %v70
  %117 = vmatpush.msra.mxu0 %v67
  %118 = vmatpush.msra.mxu0 %v64
  %119 = vmatpush.msra.mxu0 %v61
  %120 = vmatpush.msra.mxu0 %v58
  %121 = vmatpush.msra.mxu0 %v55
  %122 = vmatpush.msra.mxu0 %v52
  %123 = vmatpush.msra.mxu0 %v49
  %124 = vmatpush.msra.mxu0 %v46
  %125 = vmatpush.msra.mxu0 %v43
  %126 = vmatpush.msra.mxu0 %v40
  %127 = vmatpush.msra.mxu0 %v37
  %128 = vmatpush.msra.mxu0 %v34
  %129 = vmatpush.msra.mxu0 %v31
  %130 = vmatpush.msra.mxu0 %v28
  %131 = vmatpush.msra.mxu0 %v25
  %132 = vmatmul.f32.gmra.mxu0 %v75
  %v133 = vpop.f32.mrf.mxu0
  %v134 = vadd.f32 0.0, %v133
  %135 = vdwg.mxu0
  %v136 = vld [vmem:[%s0] sm:$0xff]
  %v137 = vld [vmem:[%s0 + $0x8] sm:$0xff]
  %v138 = vld [vmem:[%s0 + $0x10] sm:$0xff]
  %v139 = vadd.f32 %v136, %v94
  %v140 = vxor.u32 %v139, 2147483648
  %v141 = vmul.f32 %v140, 1.442695
  %v142 = vpow.pop %v141
  %v143 = vadd.f32 %v142, 1.0
  %v144 = vrcp.pop %v143
  %v145 = vmul.f32 %v143, %v144
  %v146 = vsub.f32 1.0, %v145
  %v147 = vmul.f32 %v144, %v146
  %v148 = vadd.f32 %v144, %v147
  %vm149 = vweird.f32 %v143
  %vm150 = vweird.f32 %v144
  %vm151 = vmor %vm149, %vm150
  %v152 = vsel %vm151, %v144, %v148
  %v153 = vand.u32 2147483647, %v143
  %vm154 = vcmp.eq.f32.partialorder %v153, 8.507059e+37
  %v155 = vand.u32 %v143, 2147483648
  %v156 = vor.u32 1.1754944e-38, %v155
  %v157 = vsel %vm154, %v156, %v152
  %v158 = vmul.f32 1.0, %v157
  %v159 = vadd.f32 %v137, %v114
  %v160 = vxor.u32 %v159, 2147483648
  %v161 = vmul.f32 %v160, 1.442695
  %v162 = vpow.pop %v161
  %v163 = vadd.f32 %v162, 1.0
  %v164 = vrcp.pop %v163
  %v165 = vmul.f32 %v163, %v164
  %v166 = vsub.f32 1.0, %v165
  %v167 = vmul.f32 %v164, %v166
  %v168 = vadd.f32 %v164, %v167
  %vm169 = vweird.f32 %v163
  %vm170 = vweird.f32 %v164
  %vm171 = vmor %vm169, %vm170
  %v172 = vsel %vm171, %v164, %v168
  %v173 = vand.u32 2147483647, %v163
  %vm174 = vcmp.eq.f32.partialorder %v173, 8.507059e+37
  %v175 = vand.u32 %v163, 2147483648
  %v176 = vor.u32 1.1754944e-38, %v175
  %v177 = vsel %vm174, %v176, %v172
  %v178 = vmul.f32 1.0, %v177
  %v179 = vadd.f32 %v134, %v73
  %v180 = vmul.f32 %v158, %v179
  %v181 = vadd.f32 %v138, %v180
  %v182 = vtanh.pop %v181
  %v183 = vsub.f32 1.0, %v178
  %v184 = vmul.f32 %v183, %v182
  %v185 = vmul.f32 %v178, %v75
  %v186 = vadd.f32 %v184, %v185
  %v188 = vrot.slane %v186, 1
  %v189 = vrot.slane %v186, 2
  %v190 = vrot.slane %v186, 3
  %v191 = vrot.slane %v186, 4
  %v192 = vrot.slane %v186, 5
  %v193 = vrot.slane %v186, 6
  %v194 = vrot.slane %v186, 7
  %202 = vst [vmem:[%s4] sm:$0x1] %v186
  %203 = vst [vmem:[%s4 + $0x8] sm:$0x1] %v188
  %204 = vst [vmem:[%s4 + $0x10] sm:$0x1] %v189
  %205 = vst [vmem:[%s4 + $0x18] sm:$0x1] %v190
  %206 = vst [vmem:[%s4 + $0x20] sm:$0x1] %v191
  %207 = vst [vmem:[%s4 + $0x28] sm:$0x1] %v192
  %208 = vst [vmem:[%s4 + $0x30] sm:$0x1] %v193
  %209 = vst [vmem:[%s4 + $0x38] sm:$0x1] %v194
  %210 = vmatpush.msra.mxu0 %v68
  %211 = vmatpush.msra.mxu0 %v65
  %212 = vmatpush.msra.mxu0 %v62
  %213 = vmatpush.msra.mxu0 %v59
  %214 = vmatpush.msra.mxu0 %v56
  %215 = vmatpush.msra.mxu0 %v53
  %216 = vmatpush.msra.mxu0 %v50
  %217 = vmatpush.msra.mxu0 %v47
  %218 = vmatpush.msra.mxu0 %v44
  %219 = vmatpush.msra.mxu0 %v41
  %220 = vmatpush.msra.mxu0 %v38
  %221 = vmatpush.msra.mxu0 %v35
  %222 = vmatpush.msra.mxu0 %v32
  %223 = vmatpush.msra.mxu0 %v29
  %224 = vmatpush.msra.mxu0 %v26
  %225 = vmatpush.msra.mxu0 %v23
  %226 = vmatmul.f32.gmra.mxu0 %v186
  %v227 = vpop.f32.mrf.mxu0
  %v228 = vadd.f32 0.0, %v227
  %229 = vdwg.mxu0
  %230 = vmatpush.msra.mxu0 %v69
  %231 = vmatpush.msra.mxu0 %v66
  %232 = vmatpush.msra.mxu0 %v63
  %233 = vmatpush.msra.mxu0 %v60
  %234 = vmatpush.msra.mxu0 %v57
  %235 = vmatpush.msra.mxu0 %v54
  %236 = vmatpush.msra.mxu0 %v51
  %237 = vmatpush.msra.mxu0 %v48
  %238 = vmatpush.msra.mxu0 %v45
  %239 = vmatpush.msra.mxu0 %v42
  %240 = vmatpush.msra.mxu0 %v39
  %241 = vmatpush.msra.mxu0 %v36
  %242 = vmatpush.msra.mxu0 %v33
  %243 = vmatpush.msra.mxu0 %v30
  %244 = vmatpush.msra.mxu0 %v27
  %245 = vmatpush.msra.mxu0 %v24
  %246 = vmatmul.f32.gmra.mxu0 %v186
  %v247 = vpop.f32.mrf.mxu0
  %v248 = vadd.f32 0.0, %v247
  %249 = vdwg.mxu0
  %250 = vmatpush.msra.mxu0 %v70
  %251 = vmatpush.msra.mxu0 %v67
  %252 = vmatpush.msra.mxu0 %v64
  %253 = vmatpush.msra.mxu0 %v61
  %254 = vmatpush.msra.mxu0 %v58
  %255 = vmatpush.msra.mxu0 %v55
  %256 = vmatpush.msra.mxu0 %v52
  %257 = vmatpush.msra.mxu0 %v49
  %258 = vmatpush.msra.mxu0 %v46
  %259 = vmatpush.msra.mxu0 %v43
  %260 = vmatpush.msra.mxu0 %v40
  %261 = vmatpush.msra.mxu0 %v37
  %262 = vmatpush.msra.mxu0 %v34
  %263 = vmatpush.msra.mxu0 %v31
  %264 = vmatpush.msra.mxu0 %v28
  %265 = vmatpush.msra.mxu0 %v25
  %266 = vmatmul.f32.gmra.mxu0 %v186
  %v267 = vpop.f32.mrf.mxu0
  %v268 = vadd.f32 0.0, %v267
  %269 = vdwg.mxu0
  %s270 = scalar_lea.vmem %s0, 24
  %v271 = vld [vmem:[%s270] sm:$0xff]
  %v272 = vld [vmem:[%s270 + $0x8] sm:$0xff]
  %v273 = vld [vmem:[%s270 + $0x10] sm:$0xff]
  %v274 = vadd.f32 %v271, %v228
  %v275 = vxor.u32 %v274, 2147483648
  %v276 = vmul.f32 %v275, 1.442695
  %v277 = vpow.pop %v276
  %v278 = vadd.f32 %v277, 1.0
  %v279 = vrcp.pop %v278
  %v280 = vmul.f32 %v278, %v279
  %v281 = vsub.f32 1.0, %v280
  %v282 = vmul.f32 %v279, %v281
  %v283 = vadd.f32 %v279, %v282
  %vm284 = vweird.f32 %v278
  %vm285 = vweird.f32 %v279
  %vm286 = vmor %vm284, %vm285
  %v287 = vsel %vm286, %v279, %v283
  %v288 = vand.u32 2147483647, %v278
  %vm289 = vcmp.eq.f32.partialorder %v288, 8.507059e+37
  %v290 = vand.u32 %v278, 2147483648
  %v291 = vor.u32 1.1754944e-38, %v290
  %v292 = vsel %vm289, %v291, %v287
  %v293 = vmul.f32 1.0, %v292
  %v294 = vadd.f32 %v272, %v248
  %v295 = vxor.u32 %v294, 2147483648
  %v296 = vmul.f32 %v295, 1.442695
  %v297 = vpow.pop %v296
  %v298 = vadd.f32 %v297, 1.0
  %v299 = vrcp.pop %v298
  %v300 = vmul.f32 %v298, %v299
  %v301 = vsub.f32 1.0, %v300
  %v302 = vmul.f32 %v299, %v301
  %v303 = vadd.f32 %v299, %v302
  %vm304 = vweird.f32 %v298
  %vm305 = vweird.f32 %v299
  %vm306 = vmor %vm304, %vm305
  %v307 = vsel %vm306, %v299, %v303
  %v308 = vand.u32 2147483647, %v298
  %vm309 = vcmp.eq.f32.partialorder %v308, 8.507059e+37
  %v310 = vand.u32 %v298, 2147483648
  %v311 = vor.u32 1.1754944e-38, %v310
  %v312 = vsel %vm309, %v311, %v307
  %v313 = vmul.f32 1.0, %v312
  %v314 = vadd.f32 %v268, %v73
  %v315 = vmul.f32 %v293, %v314
  %v316 = vadd.f32 %v273, %v315
  %v317 = vtanh.pop %v316
  %v318 = vsub.f32 1.0, %v313
  %v319 = vmul.f32 %v318, %v317
  %v320 = vmul.f32 %v313, %v186
  %v321 = vadd.f32 %v319, %v320
  %v323 = vrot.slane %v321, 1
  %v324 = vrot.slane %v321, 2
  %v325 = vrot.slane %v321, 3
  %v326 = vrot.slane %v321, 4
  %v327 = vrot.slane %v321, 5
  %v328 = vrot.slane %v321, 6
  %v329 = vrot.slane %v321, 7
  %337 = vst [vmem:[%s4 + $0x1] sm:$0x1] %v321
  %338 = vst [vmem:[%s4 + $0x9] sm:$0x1] %v323
  %339 = vst [vmem:[%s4 + $0x11] sm:$0x1] %v324
  %340 = vst [vmem:[%s4 + $0x19] sm:$0x1] %v325
  %341 = vst [vmem:[%s4 + $0x21] sm:$0x1] %v326
  %342 = vst [vmem:[%s4 + $0x29] sm:$0x1] %v327
  %343 = vst [vmem:[%s4 + $0x31] sm:$0x1] %v328
  %344 = vst [vmem:[%s4 + $0x39] sm:$0x1] %v329
  %345 = vmatpush.msra.mxu0 %v68
  %346 = vmatpush.msra.mxu0 %v65
  %347 = vmatpush.msra.mxu0 %v62
  %348 = vmatpush.msra.mxu0 %v59
  %349 = vmatpush.msra.mxu0 %v56
  %350 = vmatpush.msra.mxu0 %v53
  %351 = vmatpush.msra.mxu0 %v50
  %352 = vmatpush.msra.mxu0 %v47
  %353 = vmatpush.msra.mxu0 %v44
  %354 = vmatpush.msra.mxu0 %v41
  %355 = vmatpush.msra.mxu0 %v38
  %356 = vmatpush.msra.mxu0 %v35
  %357 = vmatpush.msra.mxu0 %v32
  %358 = vmatpush.msra.mxu0 %v29
  %359 = vmatpush.msra.mxu0 %v26
  %360 = vmatpush.msra.mxu0 %v23
  %361 = vmatmul.f32.gmra.mxu0 %v321
  %v362 = vpop.f32.mrf.mxu0
  %v363 = vadd.f32 0.0, %v362
  %364 = vdwg.mxu0
  %365 = vmatpush.msra.mxu0 %v69
  %366 = vmatpush.msra.mxu0 %v66
  %367 = vmatpush.msra.mxu0 %v63
  %368 = vmatpush.msra.mxu0 %v60
  %369 = vmatpush.msra.mxu0 %v57
  %370 = vmatpush.msra.mxu0 %v54
  %371 = vmatpush.msra.mxu0 %v51
  %372 = vmatpush.msra.mxu0 %v48
  %373 = vmatpush.msra.mxu0 %v45
  %374 = vmatpush.msra.mxu0 %v42
  %375 = vmatpush.msra.mxu0 %v39
  %376 = vmatpush.msra.mxu0 %v36
  %377 = vmatpush.msra.mxu0 %v33
  %378 = vmatpush.msra.mxu0 %v30
  %379 = vmatpush.msra.mxu0 %v27
  %380 = vmatpush.msra.mxu0 %v24
  %381 = vmatmul.f32.gmra.mxu0 %v321
  %v382 = vpop.f32.mrf.mxu0
  %v383 = vadd.f32 0.0, %v382
  %384 = vdwg.mxu0
  %385 = vmatpush.msra.mxu0 %v70
  %386 = vmatpush.msra.mxu0 %v67
  %387 = vmatpush.msra.mxu0 %v64
  %388 = vmatpush.msra.mxu0 %v61
  %389 = vmatpush.msra.mxu0 %v58
  %390 = vmatpush.msra.mxu0 %v55
  %391 = vmatpush.msra.mxu0 %v52
  %392 = vmatpush.msra.mxu0 %v49
  %393 = vmatpush.msra.mxu0 %v46
  %394 = vmatpush.msra.mxu0 %v43
  %395 = vmatpush.msra.mxu0 %v40
  %396 = vmatpush.msra.mxu0 %v37
  %397 = vmatpush.msra.mxu0 %v34
  %398 = vmatpush.msra.mxu0 %v31
  %399 = vmatpush.msra.mxu0 %v28
  %400 = vmatpush.msra.mxu0 %v25
  %401 = vmatmul.f32.gmra.mxu0 %v321
  %v402 = vpop.f32.mrf.mxu0
  %v403 = vadd.f32 0.0, %v402
  %404 = vdwg.mxu0
  %s405 = scalar_lea.vmem %s0, 48
  %v406 = vld [vmem:[%s405] sm:$0xff]
  %v407 = vld [vmem:[%s405 + $0x8] sm:$0xff]
  %v408 = vld [vmem:[%s405 + $0x10] sm:$0xff]
  %v409 = vadd.f32 %v406, %v363
  %v410 = vxor.u32 %v409, 2147483648
  %v411 = vmul.f32 %v410, 1.442695
  %v412 = vpow.pop %v411
  %v413 = vadd.f32 %v412, 1.0
  %v414 = vrcp.pop %v413
  %v415 = vmul.f32 %v413, %v414
  %v416 = vsub.f32 1.0, %v415
  %v417 = vmul.f32 %v414, %v416
  %v418 = vadd.f32 %v414, %v417
  %vm419 = vweird.f32 %v413
  %vm420 = vweird.f32 %v414
  %vm421 = vmor %vm419, %vm420
  %v422 = vsel %vm421, %v414, %v418
  %v423 = vand.u32 2147483647, %v413
  %vm424 = vcmp.eq.f32.partialorder %v423, 8.507059e+37
  %v425 = vand.u32 %v413, 2147483648
  %v426 = vor.u32 1.1754944e-38, %v425
  %v427 = vsel %vm424, %v426, %v422
  %v428 = vmul.f32 1.0, %v427
  %v429 = vadd.f32 %v407, %v383
  %v430 = vxor.u32 %v429, 2147483648
  %v431 = vmul.f32 %v430, 1.442695
  %v432 = vpow.pop %v431
  %v433 = vadd.f32 %v432, 1.0
  %v434 = vrcp.pop %v433
  %v435 = vmul.f32 %v433, %v434
  %v436 = vsub.f32 1.0, %v435
  %v437 = vmul.f32 %v434, %v436
  %v438 = vadd.f32 %v434, %v437
  %vm439 = vweird.f32 %v433
  %vm440 = vweird.f32 %v434
  %vm441 = vmor %vm439, %vm440
  %v442 = vsel %vm441, %v434, %v438
  %v443 = vand.u32 2147483647, %v433
  %vm444 = vcmp.eq.f32.partialorder %v443, 8.507059e+37
  %v445 = vand.u32 %v433, 2147483648
  %v446 = vor.u32 1.1754944e-38, %v445
  %v447 = vsel %vm444, %v446, %v442
  %v448 = vmul.f32 1.0, %v447
  %v449 = vadd.f32 %v403, %v73
  %v450 = vmul.f32 %v428, %v449
  %v451 = vadd.f32 %v408, %v450
  %v452 = vtanh.pop %v451
  %v453 = vsub.f32 1.0, %v448
  %v454 = vmul.f32 %v453, %v452
  %v455 = vmul.f32 %v448, %v321
  %v456 = vadd.f32 %v454, %v455
  %v458 = vrot.slane %v456, 1
  %v459 = vrot.slane %v456, 2
  %v460 = vrot.slane %v456, 3
  %v461 = vrot.slane %v456, 4
  %v462 = vrot.slane %v456, 5
  %v463 = vrot.slane %v456, 6
  %v464 = vrot.slane %v456, 7
  %472 = vst [vmem:[%s4 + $0x2] sm:$0x1] %v456
  %473 = vst [vmem:[%s4 + $0xa] sm:$0x1] %v458
  %474 = vst [vmem:[%s4 + $0x12] sm:$0x1] %v459
  %475 = vst [vmem:[%s4 + $0x1a] sm:$0x1] %v460
  %476 = vst [vmem:[%s4 + $0x22] sm:$0x1] %v461
  %477 = vst [vmem:[%s4 + $0x2a] sm:$0x1] %v462
  %478 = vst [vmem:[%s4 + $0x32] sm:$0x1] %v463
  %479 = vst [vmem:[%s4 + $0x3a] sm:$0x1] %v464
  %480 = vmatpush.msra.mxu0 %v68
  %481 = vmatpush.msra.mxu0 %v65
  %482 = vmatpush.msra.mxu0 %v62
  %483 = vmatpush.msra.mxu0 %v59
  %484 = vmatpush.msra.mxu0 %v56
  %485 = vmatpush.msra.mxu0 %v53
  %486 = vmatpush.msra.mxu0 %v50
  %487 = vmatpush.msra.mxu0 %v47
  %488 = vmatpush.msra.mxu0 %v44
  %489 = vmatpush.msra.mxu0 %v41
  %490 = vmatpush.msra.mxu0 %v38
  %491 = vmatpush.msra.mxu0 %v35
  %492 = vmatpush.msra.mxu0 %v32
  %493 = vmatpush.msra.mxu0 %v29
  %494 = vmatpush.msra.mxu0 %v26
  %495 = vmatpush.msra.mxu0 %v23
  %496 = vmatmul.f32.gmra.mxu0 %v456
  %v497 = vpop.f32.mrf.mxu0
  %v498 = vadd.f32 0.0, %v497
  %499 = vdwg.mxu0
  %500 = vmatpush.msra.mxu0 %v69
  %501 = vmatpush.msra.mxu0 %v66
  %502 = vmatpush.msra.mxu0 %v63
  %503 = vmatpush.msra.mxu0 %v60
  %504 = vmatpush.msra.mxu0 %v57
  %505 = vmatpush.msra.mxu0 %v54
  %506 = vmatpush.msra.mxu0 %v51
  %507 = vmatpush.msra.mxu0 %v48
  %508 = vmatpush.msra.mxu0 %v45
  %509 = vmatpush.msra.mxu0 %v42
  %510 = vmatpush.msra.mxu0 %v39
  %511 = vmatpush.msra.mxu0 %v36
  %512 = vmatpush.msra.mxu0 %v33
  %513 = vmatpush.msra.mxu0 %v30
  %514 = vmatpush.msra.mxu0 %v27
  %515 = vmatpush.msra.mxu0 %v24
  %516 = vmatmul.f32.gmra.mxu0 %v456
  %v517 = vpop.f32.mrf.mxu0
  %v518 = vadd.f32 0.0, %v517
  %519 = vdwg.mxu0
  %520 = vmatpush.msra.mxu0 %v70
  %521 = vmatpush.msra.mxu0 %v67
  %522 = vmatpush.msra.mxu0 %v64
  %523 = vmatpush.msra.mxu0 %v61
  %524 = vmatpush.msra.mxu0 %v58
  %525 = vmatpush.msra.mxu0 %v55
  %526 = vmatpush.msra.mxu0 %v52
  %527 = vmatpush.msra.mxu0 %v49
  %528 = vmatpush.msra.mxu0 %v46
  %529 = vmatpush.msra.mxu0 %v43
  %530 = vmatpush.msra.mxu0 %v40
  %531 = vmatpush.msra.mxu0 %v37
  %532 = vmatpush.msra.mxu0 %v34
  %533 = vmatpush.msra.mxu0 %v31
  %534 = vmatpush.msra.mxu0 %v28
  %535 = vmatpush.msra.mxu0 %v25
  %536 = vmatmul.f32.gmra.mxu0 %v456
  %v537 = vpop.f32.mrf.mxu0
  %v538 = vadd.f32 0.0, %v537
  %539 = vdwg.mxu0
  %s540 = scalar_lea.vmem %s0, 72
  %v541 = vld [vmem:[%s540] sm:$0xff]
  %v542 = vld [vmem:[%s540 + $0x8] sm:$0xff]
  %v543 = vld [vmem:[%s540 + $0x10] sm:$0xff]
  %v544 = vadd.f32 %v541, %v498
  %v545 = vxor.u32 %v544, 2147483648
  %v546 = vmul.f32 %v545, 1.442695
  %v547 = vpow.pop %v546
  %v548 = vadd.f32 %v547, 1.0
  %v549 = vrcp.pop %v548
  %v550 = vmul.f32 %v548, %v549
  %v551 = vsub.f32 1.0, %v550
  %v552 = vmul.f32 %v549, %v551
  %v553 = vadd.f32 %v549, %v552
  %vm554 = vweird.f32 %v548
  %vm555 = vweird.f32 %v549
  %vm556 = vmor %vm554, %vm555
  %v557 = vsel %vm556, %v549, %v553
  %v558 = vand.u32 2147483647, %v548
  %vm559 = vcmp.eq.f32.partialorder %v558, 8.507059e+37
  %v560 = vand.u32 %v548, 2147483648
  %v561 = vor.u32 1.1754944e-38, %v560
  %v562 = vsel %vm559, %v561, %v557
  %v563 = vmul.f32 1.0, %v562
  %v564 = vadd.f32 %v542, %v518
  %v565 = vxor.u32 %v564, 2147483648
  %v566 = vmul.f32 %v565, 1.442695
  %v567 = vpow.pop %v566
  %v568 = vadd.f32 %v567, 1.0
  %v569 = vrcp.pop %v568
  %v570 = vmul.f32 %v568, %v569
  %v571 = vsub.f32 1.0, %v570
  %v572 = vmul.f32 %v569, %v571
  %v573 = vadd.f32 %v569, %v572
  %vm574 = vweird.f32 %v568
  %vm575 = vweird.f32 %v569
  %vm576 = vmor %vm574, %vm575
  %v577 = vsel %vm576, %v569, %v573
  %v578 = vand.u32 2147483647, %v568
  %vm579 = vcmp.eq.f32.partialorder %v578, 8.507059e+37
  %v580 = vand.u32 %v568, 2147483648
  %v581 = vor.u32 1.1754944e-38, %v580
  %v582 = vsel %vm579, %v581, %v577
  %v583 = vmul.f32 1.0, %v582
  %v584 = vadd.f32 %v538, %v73
  %v585 = vmul.f32 %v563, %v584
  %v586 = vadd.f32 %v543, %v585
  %v587 = vtanh.pop %v586
  %v588 = vsub.f32 1.0, %v583
  %v589 = vmul.f32 %v588, %v587
  %v590 = vmul.f32 %v583, %v456
  %v591 = vadd.f32 %v589, %v590
  %v593 = vrot.slane %v591, 1
  %v594 = vrot.slane %v591, 2
  %v595 = vrot.slane %v591, 3
  %v596 = vrot.slane %v591, 4
  %v597 = vrot.slane %v591, 5
  %v598 = vrot.slane %v591, 6
  %v599 = vrot.slane %v591, 7
  %607 = vst [vmem:[%s4 + $0x3] sm:$0x1] %v591
  %608 = vst [vmem:[%s4 + $0xb] sm:$0x1] %v593
  %609 = vst [vmem:[%s4 + $0x13] sm:$0x1] %v594
  %610 = vst [vmem:[%s4 + $0x1b] sm:$0x1] %v595
  %611 = vst [vmem:[%s4 + $0x23] sm:$0x1] %v596
  %612 = vst [vmem:[%s4 + $0x2b] sm:$0x1] %v597
  %613 = vst [vmem:[%s4 + $0x33] sm:$0x1] %v598
  %614 = vst [vmem:[%s4 + $0x3b] sm:$0x1] %v599
  %615 = vmatpush.msra.mxu0 %v68
  %616 = vmatpush.msra.mxu0 %v65
  %617 = vmatpush.msra.mxu0 %v62
  %618 = vmatpush.msra.mxu0 %v59
  %619 = vmatpush.msra.mxu0 %v56
  %620 = vmatpush.msra.mxu0 %v53
  %621 = vmatpush.msra.mxu0 %v50
  %622 = vmatpush.msra.mxu0 %v47
  %623 = vmatpush.msra.mxu0 %v44
  %624 = vmatpush.msra.mxu0 %v41
  %625 = vmatpush.msra.mxu0 %v38
  %626 = vmatpush.msra.mxu0 %v35
  %627 = vmatpush.msra.mxu0 %v32
  %628 = vmatpush.msra.mxu0 %v29
  %629 = vmatpush.msra.mxu0 %v26
  %630 = vmatpush.msra.mxu0 %v23
  %631 = vmatmul.f32.gmra.mxu0 %v591
  %v632 = vpop.f32.mrf.mxu0
  %v633 = vadd.f32 0.0, %v632
  %634 = vdwg.mxu0
  %635 = vmatpush.msra.mxu0 %v69
  %636 = vmatpush.msra.mxu0 %v66
  %637 = vmatpush.msra.mxu0 %v63
  %638 = vmatpush.msra.mxu0 %v60
  %639 = vmatpush.msra.mxu0 %v57
  %640 = vmatpush.msra.mxu0 %v54
  %641 = vmatpush.msra.mxu0 %v51
  %642 = vmatpush.msra.mxu0 %v48
  %643 = vmatpush.msra.mxu0 %v45
  %644 = vmatpush.msra.mxu0 %v42
  %645 = vmatpush.msra.mxu0 %v39
  %646 = vmatpush.msra.mxu0 %v36
  %647 = vmatpush.msra.mxu0 %v33
  %648 = vmatpush.msra.mxu0 %v30
  %649 = vmatpush.msra.mxu0 %v27
  %650 = vmatpush.msra.mxu0 %v24
  %651 = vmatmul.f32.gmra.mxu0 %v591
  %v652 = vpop.f32.mrf.mxu0
  %v653 = vadd.f32 0.0, %v652
  %654 = vdwg.mxu0
  %655 = vmatpush.msra.mxu0 %v70
  %656 = vmatpush.msra.mxu0 %v67
  %657 = vmatpush.msra.mxu0 %v64
  %658 = vmatpush.msra.mxu0 %v61
  %659 = vmatpush.msra.mxu0 %v58
  %660 = vmatpush.msra.mxu0 %v55
  %661 = vmatpush.msra.mxu0 %v52
  %662 = vmatpush.msra.mxu0 %v49
  %663 = vmatpush.msra.mxu0 %v46
  %664 = vmatpush.msra.mxu0 %v43
  %665 = vmatpush.msra.mxu0 %v40
  %666 = vmatpush.msra.mxu0 %v37
  %667 = vmatpush.msra.mxu0 %v34
  %668 = vmatpush.msra.mxu0 %v31
  %669 = vmatpush.msra.mxu0 %v28
  %670 = vmatpush.msra.mxu0 %v25
  %671 = vmatmul.f32.gmra.mxu0 %v591
  %v672 = vpop.f32.mrf.mxu0
  %v673 = vadd.f32 0.0, %v672
  %674 = vdwg.mxu0
  %s675 = scalar_lea.vmem %s0, 96
  %v676 = vld [vmem:[%s675] sm:$0xff]
  %v677 = vld [vmem:[%s675 + $0x8] sm:$0xff]
  %v678 = vld [vmem:[%s675 + $0x10] sm:$0xff]
  %v679 = vadd.f32 %v676, %v633
  %v680 = vxor.u32 %v679, 2147483648
  %v681 = vmul.f32 %v680, 1.442695
  %v682 = vpow.pop %v681
  %v683 = vadd.f32 %v682, 1.0
  %v684 = vrcp.pop %v683
  %v685 = vmul.f32 %v683, %v684
  %v686 = vsub.f32 1.0, %v685
  %v687 = vmul.f32 %v684, %v686
  %v688 = vadd.f32 %v684, %v687
  %vm689 = vweird.f32 %v683
  %vm690 = vweird.f32 %v684
  %vm691 = vmor %vm689, %vm690
  %v692 = vsel %vm691, %v684, %v688
  %v693 = vand.u32 2147483647, %v683
  %vm694 = vcmp.eq.f32.partialorder %v693, 8.507059e+37
  %v695 = vand.u32 %v683, 2147483648
  %v696 = vor.u32 1.1754944e-38, %v695
  %v697 = vsel %vm694, %v696, %v692
  %v698 = vmul.f32 1.0, %v697
  %v699 = vadd.f32 %v677, %v653
  %v700 = vxor.u32 %v699, 2147483648
  %v701 = vmul.f32 %v700, 1.442695
  %v702 = vpow.pop %v701
  %v703 = vadd.f32 %v702, 1.0
  %v704 = vrcp.pop %v703
  %v705 = vmul.f32 %v703, %v704
  %v706 = vsub.f32 1.0, %v705
  %v707 = vmul.f32 %v704, %v706
  %v708 = vadd.f32 %v704, %v707
  %vm709 = vweird.f32 %v703
  %vm710 = vweird.f32 %v704
  %vm711 = vmor %vm709, %vm710
  %v712 = vsel %vm711, %v704, %v708
  %v713 = vand.u32 2147483647, %v703
  %vm714 = vcmp.eq.f32.partialorder %v713, 8.507059e+37
  %v715 = vand.u32 %v703, 2147483648
  %v716 = vor.u32 1.1754944e-38, %v715
  %v717 = vsel %vm714, %v716, %v712
  %v718 = vmul.f32 1.0, %v717
  %v719 = vadd.f32 %v673, %v73
  %v720 = vmul.f32 %v698, %v719
  %v721 = vadd.f32 %v678, %v720
  %v722 = vtanh.pop %v721
  %v723 = vsub.f32 1.0, %v718
  %v724 = vmul.f32 %v723, %v722
  %v725 = vmul.f32 %v718, %v591
  %v726 = vadd.f32 %v724, %v725
  %v728 = vrot.slane %v726, 1
  %v729 = vrot.slane %v726, 2
  %v730 = vrot.slane %v726, 3
  %v731 = vrot.slane %v726, 4
  %v732 = vrot.slane %v726, 5
  %v733 = vrot.slane %v726, 6
  %v734 = vrot.slane %v726, 7
  %742 = vst [vmem:[%s4 + $0x4] sm:$0x1] %v726
  %743 = vst [vmem:[%s4 + $0xc] sm:$0x1] %v728
  %744 = vst [vmem:[%s4 + $0x14] sm:$0x1] %v729
  %745 = vst [vmem:[%s4 + $0x1c] sm:$0x1] %v730
  %746 = vst [vmem:[%s4 + $0x24] sm:$0x1] %v731
  %747 = vst [vmem:[%s4 + $0x2c] sm:$0x1] %v732
  %748 = vst [vmem:[%s4 + $0x34] sm:$0x1] %v733
  %749 = vst [vmem:[%s4 + $0x3c] sm:$0x1] %v734
  %750 = vmatpush.msra.mxu0 %v68
  %751 = vmatpush.msra.mxu0 %v65
  %752 = vmatpush.msra.mxu0 %v62
  %753 = vmatpush.msra.mxu0 %v59
  %754 = vmatpush.msra.mxu0 %v56
  %755 = vmatpush.msra.mxu0 %v53
  %756 = vmatpush.msra.mxu0 %v50
  %757 = vmatpush.msra.mxu0 %v47
  %758 = vmatpush.msra.mxu0 %v44
  %759 = vmatpush.msra.mxu0 %v41
  %760 = vmatpush.msra.mxu0 %v38
  %761 = vmatpush.msra.mxu0 %v35
  %762 = vmatpush.msra.mxu0 %v32
  %763 = vmatpush.msra.mxu0 %v29
  %764 = vmatpush.msra.mxu0 %v26
  %765 = vmatpush.msra.mxu0 %v23
  %766 = vmatmul.f32.gmra.mxu0 %v726
  %v767 = vpop.f32.mrf.mxu0
  %v768 = vadd.f32 0.0, %v767
  %769 = vdwg.mxu0
  %770 = vmatpush.msra.mxu0 %v69
  %771 = vmatpush.msra.mxu0 %v66
  %772 = vmatpush.msra.mxu0 %v63
  %773 = vmatpush.msra.mxu0 %v60
  %774 = vmatpush.msra.mxu0 %v57
  %775 = vmatpush.msra.mxu0 %v54
  %776 = vmatpush.msra.mxu0 %v51
  %777 = vmatpush.msra.mxu0 %v48
  %778 = vmatpush.msra.mxu0 %v45
  %779 = vmatpush.msra.mxu0 %v42
  %780 = vmatpush.msra.mxu0 %v39
  %781 = vmatpush.msra.mxu0 %v36
  %782 = vmatpush.msra.mxu0 %v33
  %783 = vmatpush.msra.mxu0 %v30
  %784 = vmatpush.msra.mxu0 %v27
  %785 = vmatpush.msra.mxu0 %v24
  %786 = vmatmul.f32.gmra.mxu0 %v726
  %v787 = vpop.f32.mrf.mxu0
  %v788 = vadd.f32 0.0, %v787
  %789 = vdwg.mxu0
  %790 = vmatpush.msra.mxu0 %v70
  %791 = vmatpush.msra.mxu0 %v67
  %792 = vmatpush.msra.mxu0 %v64
  %793 = vmatpush.msra.mxu0 %v61
  %794 = vmatpush.msra.mxu0 %v58
  %795 = vmatpush.msra.mxu0 %v55
  %796 = vmatpush.msra.mxu0 %v52
  %797 = vmatpush.msra.mxu0 %v49
  %798 = vmatpush.msra.mxu0 %v46
  %799 = vmatpush.msra.mxu0 %v43
  %800 = vmatpush.msra.mxu0 %v40
  %801 = vmatpush.msra.mxu0 %v37
  %802 = vmatpush.msra.mxu0 %v34
  %803 = vmatpush.msra.mxu0 %v31
  %804 = vmatpush.msra.mxu0 %v28
  %805 = vmatpush.msra.mxu0 %v25
  %806 = vmatmul.f32.gmra.mxu0 %v726
  %v807 = vpop.f32.mrf.mxu0
  %v808 = vadd.f32 0.0, %v807
  %809 = vdwg.mxu0
  %s810 = scalar_lea.vmem %s0, 120
  %v811 = vld [vmem:[%s810] sm:$0xff]
  %v812 = vld [vmem:[%s810 + $0x8] sm:$0xff]
  %v813 = vld [vmem:[%s810 + $0x10] sm:$0xff]
  %v814 = vadd.f32 %v811, %v768
  %v815 = vxor.u32 %v814, 2147483648
  %v816 = vmul.f32 %v815, 1.442695
  %v817 = vpow.pop %v816
  %v818 = vadd.f32 %v817, 1.0
  %v819 = vrcp.pop %v818
  %v820 = vmul.f32 %v818, %v819
  %v821 = vsub.f32 1.0, %v820
  %v822 = vmul.f32 %v819, %v821
  %v823 = vadd.f32 %v819, %v822
  %vm824 = vweird.f32 %v818
  %vm825 = vweird.f32 %v819
  %vm826 = vmor %vm824, %vm825
  %v827 = vsel %vm826, %v819, %v823
  %v828 = vand.u32 2147483647, %v818
  %vm829 = vcmp.eq.f32.partialorder %v828, 8.507059e+37
  %v830 = vand.u32 %v818, 2147483648
  %v831 = vor.u32 1.1754944e-38, %v830
  %v832 = vsel %vm829, %v831, %v827
  %v833 = vmul.f32 1.0, %v832
  %v834 = vadd.f32 %v812, %v788
  %v835 = vxor.u32 %v834, 2147483648
  %v836 = vmul.f32 %v835, 1.442695
  %v837 = vpow.pop %v836
  %v838 = vadd.f32 %v837, 1.0
  %v839 = vrcp.pop %v838
  %v840 = vmul.f32 %v838, %v839
  %v841 = vsub.f32 1.0, %v840
  %v842 = vmul.f32 %v839, %v841
  %v843 = vadd.f32 %v839, %v842
  %vm844 = vweird.f32 %v838
  %vm845 = vweird.f32 %v839
  %vm846 = vmor %vm844, %vm845
  %v847 = vsel %vm846, %v839, %v843
  %v848 = vand.u32 2147483647, %v838
  %vm849 = vcmp.eq.f32.partialorder %v848, 8.507059e+37
  %v850 = vand.u32 %v838, 2147483648
  %v851 = vor.u32 1.1754944e-38, %v850
  %v852 = vsel %vm849, %v851, %v847
  %v853 = vmul.f32 1.0, %v852
  %v854 = vadd.f32 %v808, %v73
  %v855 = vmul.f32 %v833, %v854
  %v856 = vadd.f32 %v813, %v855
  %v857 = vtanh.pop %v856
  %v858 = vsub.f32 1.0, %v853
  %v859 = vmul.f32 %v858, %v857
  %v860 = vmul.f32 %v853, %v726
  %v861 = vadd.f32 %v859, %v860
  %v863 = vrot.slane %v861, 1
  %v864 = vrot.slane %v861, 2
  %v865 = vrot.slane %v861, 3
  %v866 = vrot.slane %v861, 4
  %v867 = vrot.slane %v861, 5
  %v868 = vrot.slane %v861, 6
  %v869 = vrot.slane %v861, 7
  %877 = vst [vmem:[%s4 + $0x5] sm:$0x1] %v861
  %878 = vst [vmem:[%s4 + $0xd] sm:$0x1] %v863
  %879 = vst [vmem:[%s4 + $0x15] sm:$0x1] %v864
  %880 = vst [vmem:[%s4 + $0x1d] sm:$0x1] %v865
  %881 = vst [vmem:[%s4 + $0x25] sm:$0x1] %v866
  %882 = vst [vmem:[%s4 + $0x2d] sm:$0x1] %v867
  %883 = vst [vmem:[%s4 + $0x35] sm:$0x1] %v868
  %884 = vst [vmem:[%s4 + $0x3d] sm:$0x1] %v869
  %885 = vmatpush.msra.mxu0 %v68
  %886 = vmatpush.msra.mxu0 %v65
  %887 = vmatpush.msra.mxu0 %v62
  %888 = vmatpush.msra.mxu0 %v59
  %889 = vmatpush.msra.mxu0 %v56
  %890 = vmatpush.msra.mxu0 %v53
  %891 = vmatpush.msra.mxu0 %v50
  %892 = vmatpush.msra.mxu0 %v47
  %893 = vmatpush.msra.mxu0 %v44
  %894 = vmatpush.msra.mxu0 %v41
  %895 = vmatpush.msra.mxu0 %v38
  %896 = vmatpush.msra.mxu0 %v35
  %897 = vmatpush.msra.mxu0 %v32
  %898 = vmatpush.msra.mxu0 %v29
  %899 = vmatpush.msra.mxu0 %v26
  %900 = vmatpush.msra.mxu0 %v23
  %901 = vmatmul.f32.gmra.mxu0 %v861
  %v902 = vpop.f32.mrf.mxu0
  %v903 = vadd.f32 0.0, %v902
  %904 = vdwg.mxu0
  %905 = vmatpush.msra.mxu0 %v69
  %906 = vmatpush.msra.mxu0 %v66
  %907 = vmatpush.msra.mxu0 %v63
  %908 = vmatpush.msra.mxu0 %v60
  %909 = vmatpush.msra.mxu0 %v57
  %910 = vmatpush.msra.mxu0 %v54
  %911 = vmatpush.msra.mxu0 %v51
  %912 = vmatpush.msra.mxu0 %v48
  %913 = vmatpush.msra.mxu0 %v45
  %914 = vmatpush.msra.mxu0 %v42
  %915 = vmatpush.msra.mxu0 %v39
  %916 = vmatpush.msra.mxu0 %v36
  %917 = vmatpush.msra.mxu0 %v33
  %918 = vmatpush.msra.mxu0 %v30
  %919 = vmatpush.msra.mxu0 %v27
  %920 = vmatpush.msra.mxu0 %v24
  %921 = vmatmul.f32.gmra.mxu0 %v861
  %v922 = vpop.f32.mrf.mxu0
  %v923 = vadd.f32 0.0, %v922
  %924 = vdwg.mxu0
  %925 = vmatpush.msra.mxu0 %v70
  %926 = vmatpush.msra.mxu0 %v67
  %927 = vmatpush.msra.mxu0 %v64
  %928 = vmatpush.msra.mxu0 %v61
  %929 = vmatpush.msra.mxu0 %v58
  %930 = vmatpush.msra.mxu0 %v55
  %931 = vmatpush.msra.mxu0 %v52
  %932 = vmatpush.msra.mxu0 %v49
  %933 = vmatpush.msra.mxu0 %v46
  %934 = vmatpush.msra.mxu0 %v43
  %935 = vmatpush.msra.mxu0 %v40
  %936 = vmatpush.msra.mxu0 %v37
  %937 = vmatpush.msra.mxu0 %v34
  %938 = vmatpush.msra.mxu0 %v31
  %939 = vmatpush.msra.mxu0 %v28
  %940 = vmatpush.msra.mxu0 %v25
  %941 = vmatmul.f32.gmra.mxu0 %v861
  %v942 = vpop.f32.mrf.mxu0
  %v943 = vadd.f32 0.0, %v942
  %944 = vdwg.mxu0
  %s945 = scalar_lea.vmem %s0, 144
  %v946 = vld [vmem:[%s945] sm:$0xff]
  %v947 = vld [vmem:[%s945 + $0x8] sm:$0xff]
  %v948 = vld [vmem:[%s945 + $0x10] sm:$0xff]
  %v949 = vadd.f32 %v946, %v903
  %v950 = vxor.u32 %v949, 2147483648
  %v951 = vmul.f32 %v950, 1.442695
  %v952 = vpow.pop %v951
  %v953 = vadd.f32 %v952, 1.0
  %v954 = vrcp.pop %v953
  %v955 = vmul.f32 %v953, %v954
  %v956 = vsub.f32 1.0, %v955
  %v957 = vmul.f32 %v954, %v956
  %v958 = vadd.f32 %v954, %v957
  %vm959 = vweird.f32 %v953
  %vm960 = vweird.f32 %v954
  %vm961 = vmor %vm959, %vm960
  %v962 = vsel %vm961, %v954, %v958
  %v963 = vand.u32 2147483647, %v953
  %vm964 = vcmp.eq.f32.partialorder %v963, 8.507059e+37
  %v965 = vand.u32 %v953, 2147483648
  %v966 = vor.u32 1.1754944e-38, %v965
  %v967 = vsel %vm964, %v966, %v962
  %v968 = vmul.f32 1.0, %v967
  %v969 = vadd.f32 %v947, %v923
  %v970 = vxor.u32 %v969, 2147483648
  %v971 = vmul.f32 %v970, 1.442695
  %v972 = vpow.pop %v971
  %v973 = vadd.f32 %v972, 1.0
  %v974 = vrcp.pop %v973
  %v975 = vmul.f32 %v973, %v974
  %v976 = vsub.f32 1.0, %v975
  %v977 = vmul.f32 %v974, %v976
  %v978 = vadd.f32 %v974, %v977
  %vm979 = vweird.f32 %v973
  %vm980 = vweird.f32 %v974
  %vm981 = vmor %vm979, %vm980
  %v982 = vsel %vm981, %v974, %v978
  %v983 = vand.u32 2147483647, %v973
  %vm984 = vcmp.eq.f32.partialorder %v983, 8.507059e+37
  %v985 = vand.u32 %v973, 2147483648
  %v986 = vor.u32 1.1754944e-38, %v985
  %v987 = vsel %vm984, %v986, %v982
  %v988 = vmul.f32 1.0, %v987
  %v989 = vadd.f32 %v943, %v73
  %v990 = vmul.f32 %v968, %v989
  %v991 = vadd.f32 %v948, %v990
  %v992 = vtanh.pop %v991
  %v993 = vsub.f32 1.0, %v988
  %v994 = vmul.f32 %v993, %v992
  %v995 = vmul.f32 %v988, %v861
  %v996 = vadd.f32 %v994, %v995
  %v998 = vrot.slane %v996, 1
  %v999 = vrot.slane %v996, 2
  %v1000 = vrot.slane %v996, 3
  %v1001 = vrot.slane %v996, 4
  %v1002 = vrot.slane %v996, 5
  %v1003 = vrot.slane %v996, 6
  %v1004 = vrot.slane %v996, 7
  %1012 = vst [vmem:[%s4 + $0x6] sm:$0x1] %v996
  %1013 = vst [vmem:[%s4 + $0xe] sm:$0x1] %v998
  %1014 = vst [vmem:[%s4 + $0x16] sm:$0x1] %v999
  %1015 = vst [vmem:[%s4 + $0x1e] sm:$0x1] %v1000
  %1016 = vst [vmem:[%s4 + $0x26] sm:$0x1] %v1001
  %1017 = vst [vmem:[%s4 + $0x2e] sm:$0x1] %v1002
  %1018 = vst [vmem:[%s4 + $0x36] sm:$0x1] %v1003
  %1019 = vst [vmem:[%s4 + $0x3e] sm:$0x1] %v1004
  %1020 = vmatpush.msra.mxu0 %v68
  %1021 = vmatpush.msra.mxu0 %v65
  %1022 = vmatpush.msra.mxu0 %v62
  %1023 = vmatpush.msra.mxu0 %v59
  %1024 = vmatpush.msra.mxu0 %v56
  %1025 = vmatpush.msra.mxu0 %v53
  %1026 = vmatpush.msra.mxu0 %v50
  %1027 = vmatpush.msra.mxu0 %v47
  %1028 = vmatpush.msra.mxu0 %v44
  %1029 = vmatpush.msra.mxu0 %v41
  %1030 = vmatpush.msra.mxu0 %v38
  %1031 = vmatpush.msra.mxu0 %v35
  %1032 = vmatpush.msra.mxu0 %v32
  %1033 = vmatpush.msra.mxu0 %v29
  %1034 = vmatpush.msra.mxu0 %v26
  %1035 = vmatpush.msra.mxu0 %v23
  %1036 = vmatmul.f32.gmra.mxu0 %v996
  %v1037 = vpop.f32.mrf.mxu0
  %v1038 = vadd.f32 0.0, %v1037
  %1039 = vdwg.mxu0
  %1040 = vmatpush.msra.mxu0 %v69
  %1041 = vmatpush.msra.mxu0 %v66
  %1042 = vmatpush.msra.mxu0 %v63
  %1043 = vmatpush.msra.mxu0 %v60
  %1044 = vmatpush.msra.mxu0 %v57
  %1045 = vmatpush.msra.mxu0 %v54
  %1046 = vmatpush.msra.mxu0 %v51
  %1047 = vmatpush.msra.mxu0 %v48
  %1048 = vmatpush.msra.mxu0 %v45
  %1049 = vmatpush.msra.mxu0 %v42
  %1050 = vmatpush.msra.mxu0 %v39
  %1051 = vmatpush.msra.mxu0 %v36
  %1052 = vmatpush.msra.mxu0 %v33
  %1053 = vmatpush.msra.mxu0 %v30
  %1054 = vmatpush.msra.mxu0 %v27
  %1055 = vmatpush.msra.mxu0 %v24
  %1056 = vmatmul.f32.gmra.mxu0 %v996
  %v1057 = vpop.f32.mrf.mxu0
  %v1058 = vadd.f32 0.0, %v1057
  %1059 = vdwg.mxu0
  %1060 = vmatpush.msra.mxu0 %v70
  %1061 = vmatpush.msra.mxu0 %v67
  %1062 = vmatpush.msra.mxu0 %v64
  %1063 = vmatpush.msra.mxu0 %v61
  %1064 = vmatpush.msra.mxu0 %v58
  %1065 = vmatpush.msra.mxu0 %v55
  %1066 = vmatpush.msra.mxu0 %v52
  %1067 = vmatpush.msra.mxu0 %v49
  %1068 = vmatpush.msra.mxu0 %v46
  %1069 = vmatpush.msra.mxu0 %v43
  %1070 = vmatpush.msra.mxu0 %v40
  %1071 = vmatpush.msra.mxu0 %v37
  %1072 = vmatpush.msra.mxu0 %v34
  %1073 = vmatpush.msra.mxu0 %v31
  %1074 = vmatpush.msra.mxu0 %v28
  %1075 = vmatpush.msra.mxu0 %v25
  %1076 = vmatmul.f32.gmra.mxu0 %v996
  %v1077 = vpop.f32.mrf.mxu0
  %v1078 = vadd.f32 0.0, %v1077
  %1079 = vdwg.mxu0
  %s1080 = scalar_lea.vmem %s0, 168
  %v1081 = vld [vmem:[%s1080] sm:$0xff]
  %v1082 = vld [vmem:[%s1080 + $0x8] sm:$0xff]
  %v1083 = vld [vmem:[%s1080 + $0x10] sm:$0xff]
  %v1084 = vadd.f32 %v1081, %v1038
  %v1085 = vxor.u32 %v1084, 2147483648
  %v1086 = vmul.f32 %v1085, 1.442695
  %v1087 = vpow.pop %v1086
  %v1088 = vadd.f32 %v1087, 1.0
  %v1089 = vrcp.pop %v1088
  %v1090 = vmul.f32 %v1088, %v1089
  %v1091 = vsub.f32 1.0, %v1090
  %v1092 = vmul.f32 %v1089, %v1091
  %v1093 = vadd.f32 %v1089, %v1092
  %vm1094 = vweird.f32 %v1088
  %vm1095 = vweird.f32 %v1089
  %vm1096 = vmor %vm1094, %vm1095
  %v1097 = vsel %vm1096, %v1089, %v1093
  %v1098 = vand.u32 2147483647, %v1088
  %vm1099 = vcmp.eq.f32.partialorder %v1098, 8.507059e+37
  %v1100 = vand.u32 %v1088, 2147483648
  %v1101 = vor.u32 1.1754944e-38, %v1100
  %v1102 = vsel %vm1099, %v1101, %v1097
  %v1103 = vmul.f32 1.0, %v1102
  %v1104 = vadd.f32 %v1082, %v1058
  %v1105 = vxor.u32 %v1104, 2147483648
  %v1106 = vmul.f32 %v1105, 1.442695
  %v1107 = vpow.pop %v1106
  %v1108 = vadd.f32 %v1107, 1.0
  %v1109 = vrcp.pop %v1108
  %v1110 = vmul.f32 %v1108, %v1109
  %v1111 = vsub.f32 1.0, %v1110
  %v1112 = vmul.f32 %v1109, %v1111
  %v1113 = vadd.f32 %v1109, %v1112
  %vm1114 = vweird.f32 %v1108
  %vm1115 = vweird.f32 %v1109
  %vm1116 = vmor %vm1114, %vm1115
  %v1117 = vsel %vm1116, %v1109, %v1113
  %v1118 = vand.u32 2147483647, %v1108
  %vm1119 = vcmp.eq.f32.partialorder %v1118, 8.507059e+37
  %v1120 = vand.u32 %v1108, 2147483648
  %v1121 = vor.u32 1.1754944e-38, %v1120
  %v1122 = vsel %vm1119, %v1121, %v1117
  %v1123 = vmul.f32 1.0, %v1122
  %v1124 = vadd.f32 %v1078, %v73
  %v1125 = vmul.f32 %v1103, %v1124
  %v1126 = vadd.f32 %v1083, %v1125
  %v1127 = vtanh.pop %v1126
  %v1128 = vsub.f32 1.0, %v1123
  %v1129 = vmul.f32 %v1128, %v1127
  %v1130 = vmul.f32 %v1123, %v996
  %v1131 = vadd.f32 %v1129, %v1130
  %v1133 = vrot.slane %v1131, 1
  %v1134 = vrot.slane %v1131, 2
  %v1135 = vrot.slane %v1131, 3
  %v1136 = vrot.slane %v1131, 4
  %v1137 = vrot.slane %v1131, 5
  %v1138 = vrot.slane %v1131, 6
  %v1139 = vrot.slane %v1131, 7
  %1147 = vst [vmem:[%s4 + $0x7] sm:$0x1] %v1131
  %1148 = vst [vmem:[%s4 + $0xf] sm:$0x1] %v1133
  %1149 = vst [vmem:[%s4 + $0x17] sm:$0x1] %v1134
  %1150 = vst [vmem:[%s4 + $0x1f] sm:$0x1] %v1135
  %1151 = vst [vmem:[%s4 + $0x27] sm:$0x1] %v1136
  %1152 = vst [vmem:[%s4 + $0x2f] sm:$0x1] %v1137
  %1153 = vst [vmem:[%s4 + $0x37] sm:$0x1] %v1138
  %1154 = vst [vmem:[%s4 + $0x3f] sm:$0x1] %v1139
  %1155 = vst [vmem:[#allocation2] sm:$0xff] %v1131
  // Predicated region
  $region22: #{policy_network_forward.4} parent=0 // pred_check
    _
  $region23: #{policy_network_forward.4} parent=0 // pred_check_branch
    %1157 = sbr.rel (0) target = $region25
  $region24: #{policy_network_forward.4} parent=0 // pred_region
    _
  $region25: #{policy_network_forward.4} parent=0 // pred_fallthru
    _
  // Predicated region
  $region26: #{policy_network_forward.4} parent=0 // pred_check
    _
  $region27: #{policy_network_forward.4} parent=0 // pred_check_branch
    %1159 = sbr.rel (0) target = $region29
  $region28: #{policy_network_forward.4} parent=0 // pred_region
    _
  $region29: #{policy_network_forward.4} parent=0 // pred_fallthru
    _

</llo_original>
